<compile_context>
chip_gen: v7x
topology: tpu7x:2x2x1
jax: 0.10.0
libtpu: 0.0.40
codegen_flags: <defaults>
</compile_context>

<pallas_src>
import functools
import math

import jax
import jax.numpy as jnp
import numpy as np
from jax.experimental import pallas as pl
from jax.experimental.pallas import tpu as pltpu


def _attention_block_kernel(x_ref, gamma_ref, beta_ref, ga_ref,
                            wqkv_ref, bqkv_ref, wp_ref, bp_ref,
                            out_ref, xn_ref, qkv_ref, *, approx):
    qi = pl.program_id(1)
    N = x_ref.shape[1]
    Cp = x_ref.shape[2]
    tq = out_ref.shape[1]

    # ---- once per batch element: GroupNorm + fused QKV projection ----------
    @pl.when(qi == 0)
    def _():
        x = x_ref[0].astype(jnp.float32)                        # (N, Cp)
        ch_sum = jnp.sum(x, axis=0, keepdims=True)              # (1, Cp)
        ch_sq = jnp.sum(x * x, axis=0, keepdims=True)           # (1, Cp)
        # ga folds gather -> group-mean -> scatter into ONE (Cp,Cp) matmul;
        # padded channels map to 0 (zero rows/cols).
        mean_c = jnp.dot(ch_sum, ga_ref[...], preferred_element_type=jnp.float32)
        e2_c = jnp.dot(ch_sq, ga_ref[...], preferred_element_type=jnp.float32)
        var_c = e2_c - mean_c * mean_c
        xn = (x - mean_c) * jax.lax.rsqrt(var_c + jnp.float32(1e-5))
        xn = xn * gamma_ref[...] + beta_ref[...]                # pads stay 0
        xn_ref[...] = xn
        # Fused QKV: single (N,Cp)@(Cp,3Cp) MXU pass; q-scale folded in weights.
        qkv = jnp.dot(xn.astype(wqkv_ref.dtype), wqkv_ref[...],
                      preferred_element_type=jnp.float32) + bqkv_ref[...]
        qkv_ref[...] = qkv.astype(qkv_ref.dtype)

    # ---- attention for this query tile (all keys resident -> exact softmax) -
    row0 = pl.multiple_of(qi * tq, tq)
    q = qkv_ref[pl.ds(row0, tq), :Cp]                    # (tq, Cp), pre-scaled
    k = qkv_ref[:, Cp:2 * Cp]                            # (N, Cp)
    v = qkv_ref[:, 2 * Cp:3 * Cp]                        # (N, Cp)

    # Contract the channel dim directly; no k transpose materialized.
    logits = jax.lax.dot_general(q, k, (((1,), (1,)), ((), ())),
                                 preferred_element_type=jnp.float32)  # (tq, N)
    logits = logits - jnp.max(logits, axis=-1, keepdims=True)
    p = jnp.exp(logits)
    p = p * pl.reciprocal(jnp.sum(p, axis=-1, keepdims=True), approx=approx)

    o = jnp.dot(p.astype(v.dtype), v, preferred_element_type=jnp.float32)  # (tq, Cp)
    o = jnp.dot(o.astype(wp_ref.dtype), wp_ref[...],
                preferred_element_type=jnp.float32) + bp_ref[...]
    out_ref[0] = (o + xn_ref[pl.ds(row0, tq), :]).astype(out_ref.dtype)


def _choose_tq(n):
    for t in (512, 256, 128, 64, 32, 16, 8):
        if n % t == 0:
            return t
    return n


def attention_block_pallas(x_nchw, params, *, compute_dtype=jnp.bfloat16):
    """x_nchw: (B, C, H, W) float32. params: dict of weights (see init_params)."""
    B, C, H, W = x_nchw.shape
    G = 8
    assert C % G == 0, "GroupNorm(8, C) requires C % 8 == 0"
    N = H * W
    Cp = max(128, -(-C // 128) * 128)            # lane-dense channel padding
    tq = _choose_tq(N)
    nq = N // tq
    scale = float(C) ** -0.5                     # scale uses ORIGINAL C

    # tokens (B, N, Cp), zero-padded channels
    x_tok = jnp.transpose(x_nchw.reshape(B, C, N), (0, 2, 1))
    x_tok = jnp.pad(x_tok, ((0, 0), (0, 0), (0, Cp - C)))

    padc = lambda a: jnp.pad(a, (0, Cp - C)).reshape(1, Cp)
    pad2 = lambda w: jnp.pad(w, ((0, Cp - C), (0, Cp - C)))     # w is (in, out)

    gamma = padc(params["gamma"])                # pads are 0 -> xn pad channels = 0
    beta = padc(params["beta"])
    # Fused QKV weight (Cp, 3Cp); PyTorch Linear is x @ W.T + b, so pre-transpose.
    w_qkv_t = jnp.concatenate([pad2(params["wq"].T * scale),
                               pad2(params["wk"].T),
                               pad2(params["wv"].T)], axis=1).astype(compute_dtype)
    b_qkv = jnp.concatenate([padc(params["bq"] * scale),
                             padc(params["bk"]),
                             padc(params["bv"])], axis=1)        # (1, 3Cp) f32
    wp_t = pad2(params["wp"].T).astype(compute_dtype)
    bp = padc(params["bp"])

    # Group-mean matrix: ga[i, j] = 1/(N*group_size) if real channels i, j share
    # a group, else 0.  (1,Cp) @ ga == per-channel broadcast of the group mean.
    gs = C // G
    cid = np.arange(Cp)
    gid = np.where(cid < C, cid // gs, -1)
    ga = jnp.asarray(((gid[:, None] == gid[None, :]) & (gid[:, None] >= 0))
                     .astype(np.float32) / float(N * gs))

    # Resident-footprint estimate -> explicit vmem limit (capped under physical).
    cd = jnp.dtype(compute_dtype).itemsize
    est = (2 * (N * Cp * 4 + tq * Cp * 4                         # x / out blocks (x2 buf)
                + Cp * 3 * Cp * cd + Cp * Cp * cd + Cp * Cp * 4  # Wqkv, Wp, ga
                + 8 * Cp * 4)                                    # gamma/beta/biases
           + N * Cp * 4 + N * 3 * Cp * cd                        # xn / qkv scratch
           + 3 * tq * N * 4)                                     # logits-sized temps
    vmem_limit = int(min(max(2 * est, 32 * 1024 * 1024), 64 * 1024 * 1024))

    # Grid-invariant operands use a constant index_map, so they are DMA'd once;
    # (single-buffering them via pipeline_mode is a further VMEM saving at big C).
    wspec = lambda shape: pl.BlockSpec(shape, lambda b, qi: (0,) * len(shape))

    kernel = functools.partial(
        _attention_block_kernel,
        approx=(jnp.dtype(compute_dtype) != jnp.dtype(jnp.float32)))

    out_tok = pl.pallas_call(
        kernel,
        out_shape=jax.ShapeDtypeStruct((B, N, Cp), x_nchw.dtype),
        grid_spec=pltpu.PrefetchScalarGridSpec(
            num_scalar_prefetch=0,
            grid=(B, nq),                                       # (batch, q-tile)
            in_specs=[
                pl.BlockSpec((1, N, Cp), lambda b, qi: (b, 0, 0)),  # x tokens
                wspec((1, Cp)), wspec((1, Cp)),                  # gamma, beta
                wspec((Cp, Cp)),                                 # group-mean matrix
                wspec((Cp, 3 * Cp)), wspec((1, 3 * Cp)),         # fused Wqkv^T, bqkv
                wspec((Cp, Cp)), wspec((1, Cp)),                 # Wp^T, bp
            ],
            out_specs=pl.BlockSpec((1, tq, Cp), lambda b, qi: (b, qi, 0)),
            scratch_shapes=[
                pltpu.VMEM((N, Cp), jnp.float32),       # normalized x (residual)
                pltpu.VMEM((N, 3 * Cp), compute_dtype), # fused q|k|v (q pre-scaled)
            ],
        ),
        compiler_params=pltpu.CompilerParams(
            dimension_semantics=("parallel", "arbitrary"),
            vmem_limit_bytes=vmem_limit),
    )(x_tok, gamma, beta, ga, w_qkv_t, b_qkv, wp_t, bp)

    out_tok = out_tok[:, :, :C]                 # drop padded channels
    return jnp.transpose(out_tok, (0, 2, 1)).reshape(B, C, H, W)


def attention_block_ref(x_nchw, params):
    """Pure-JAX reference mirroring the PyTorch forward exactly."""
    B, C, H, W = x_nchw.shape
    G = 8
    eps = 1e-5
    xg = x_nchw.reshape(B, G, C // G, H, W)
    mean = xg.mean(axis=(2, 3, 4), keepdims=True)
    var = xg.var(axis=(2, 3, 4), keepdims=True)
    xn = ((xg - mean) / jnp.sqrt(var + eps)).reshape(B, C, H, W)
    xn = xn * params["gamma"][None, :, None, None] + params["beta"][None, :, None, None]
    x_tok = jnp.transpose(xn.reshape(B, C, H * W), (0, 2, 1))          # (B, N, C)
    q = x_tok @ params["wq"].T + params["bq"]
    k = x_tok @ params["wk"].T + params["bk"]
    v = x_tok @ params["wv"].T + params["bv"]
    attn = jnp.einsum("bnc,bmc->bnm", q, k) * (C ** -0.5)
    attn = jax.nn.softmax(attn, axis=-1)
    out = attn @ v
    out = out @ params["wp"].T + params["bp"]
    out = jnp.transpose(out, (0, 2, 1)).reshape(B, C, H, W)
    return out + xn


def init_params(key, channels):
    ks = jax.random.split(key, 8)
    bound = 1.0 / math.sqrt(channels)
    u = lambda k, shape: jax.random.uniform(k, shape, jnp.float32, -bound, bound)
    return {
        "gamma": jnp.ones((channels,), jnp.float32),
        "beta": jnp.zeros((channels,), jnp.float32),
        "wq": u(ks[0], (channels, channels)), "bq": u(ks[1], (channels,)),
        "wk": u(ks[2], (channels, channels)), "bk": u(ks[3], (channels,)),
        "wv": u(ks[4], (channels, channels)), "bv": u(ks[5], (channels,)),
        "wp": u(ks[6], (channels, channels)), "bp": u(ks[7], (channels,)),
    }


if __name__ == "__main__":
    key = jax.random.PRNGKey(0)
    k_x, k_p = jax.random.split(key)

    B, C, H, W = 2, 32, 8, 8   # C must be divisible by 8 (GroupNorm groups)
    x = jax.random.normal(k_x, (B, C, H, W), jnp.float32)
    params = init_params(k_p, C)

    ref = jax.block_until_ready(attention_block_ref(x, params))

    # Strict check: f32 MXU path, exact reciprocal — bit-for-bit semantics.
    out_f32 = jax.block_until_ready(
        attention_block_pallas(x, params, compute_dtype=jnp.float32))
    np.testing.assert_allclose(np.asarray(out_f32), np.asarray(ref),
                               rtol=2e-4, atol=2e-4)

    # Perf mode (default): bf16 matmul operands + approx reciprocal.
    # Tolerance deliberately loosened for bf16 operand rounding (~4e-3 relative).
    out_bf16 = jax.block_until_ready(attention_block_pallas(x, params))
    np.testing.assert_allclose(np.asarray(out_bf16), np.asarray(ref),
                               rtol=2e-2, atol=2e-2)

    print("KERNEL_OK")
</pallas_src>

<mosaic_0001>
module attributes {stable_mosaic.version = 11 : i64} {
  func.func @_attention_block_kernel(%arg0: i32, %arg1: i32, %arg2: memref<1x64x128xf32, #tpu.memory_space<vmem>>, %arg3: memref<1x128xf32, #tpu.memory_space<vmem>>, %arg4: memref<1x128xf32, #tpu.memory_space<vmem>>, %arg5: memref<128x128xf32, #tpu.memory_space<vmem>>, %arg6: memref<128x384xf32, #tpu.memory_space<vmem>>, %arg7: memref<1x384xf32, #tpu.memory_space<vmem>>, %arg8: memref<128x128xf32, #tpu.memory_space<vmem>>, %arg9: memref<1x128xf32, #tpu.memory_space<vmem>>, %arg10: memref<1x64x128xf32, #tpu.memory_space<vmem>>, %arg11: memref<64x128xf32, #tpu.memory_space<vmem>>, %arg12: memref<64x384xf32, #tpu.memory_space<vmem>>) attributes {dimension_semantics = [#tpu.dimension_semantics<parallel>, #tpu.dimension_semantics<arbitrary>], iteration_bounds = array<i64: 2, 1>, scalar_prefetch = 0 : i64, scratch_operands = 2 : i64, tpu.core_type = #tpu.core_type<tc>, window_params = [{transform_indices = @transform_0, window_bounds = array<i64: 1, 64, 128>}, {pipeline_mode = #tpu.pipeline_mode<synchronous>, transform_indices = @transform_1, window_bounds = array<i64: 1, 128>}, {pipeline_mode = #tpu.pipeline_mode<synchronous>, transform_indices = @transform_2, window_bounds = array<i64: 1, 128>}, {pipeline_mode = #tpu.pipeline_mode<synchronous>, transform_indices = @transform_3, window_bounds = array<i64: 128, 128>}, {pipeline_mode = #tpu.pipeline_mode<synchronous>, transform_indices = @transform_4, window_bounds = array<i64: 128, 384>}, {pipeline_mode = #tpu.pipeline_mode<synchronous>, transform_indices = @transform_5, window_bounds = array<i64: 1, 384>}, {pipeline_mode = #tpu.pipeline_mode<synchronous>, transform_indices = @transform_6, window_bounds = array<i64: 128, 128>}, {pipeline_mode = #tpu.pipeline_mode<synchronous>, transform_indices = @transform_7, window_bounds = array<i64: 1, 128>}, {transform_indices = @transform_8, window_bounds = array<i64: 1, 64, 128>}]} {
    %c0_i32 = arith.constant 0 : i32
    %0 = arith.cmpi eq, %arg1, %c0_i32 : i32
    %1 = arith.extui %0 : i1 to i32
    %c0_i32_0 = arith.constant 0 : i32
    %2 = arith.cmpi ne, %1, %c0_i32_0 : i32
    scf.if %2 {
      %c0_15 = arith.constant 0 : index
      %c0_16 = arith.constant 0 : index
      %c0_17 = arith.constant 0 : index
      %32 = vector.load %arg2[%c0_15, %c0_16, %c0_17] : memref<1x64x128xf32, #tpu.memory_space<vmem>>, vector<1x64x128xf32>
      %33 = vector.shape_cast %32 : vector<1x64x128xf32> to vector<64x128xf32>
      %cst_18 = arith.constant dense<0.000000e+00> : vector<128xf32>
      %34 = vector.multi_reduction <add>, %33, %cst_18 [0] : vector<64x128xf32> to vector<128xf32>
      %35 = vector.shape_cast %34 : vector<128xf32> to vector<1x128xf32>
      %36 = arith.mulf %33, %33 : vector<64x128xf32>
      %cst_19 = arith.constant dense<0.000000e+00> : vector<128xf32>
      %37 = vector.multi_reduction <add>, %36, %cst_19 [0] : vector<64x128xf32> to vector<128xf32>
      %38 = vector.shape_cast %37 : vector<128xf32> to vector<1x128xf32>
      %c0_20 = arith.constant 0 : index
      %c0_21 = arith.constant 0 : index
      %39 = vector.load %arg5[%c0_20, %c0_21] : memref<128x128xf32, #tpu.memory_space<vmem>>, vector<128x128xf32>
      %cst_22 = arith.constant dense<0.000000e+00> : vector<1x128xf32>
      %40 = tpu.matmul %35, %39, %cst_22 {dimension_numbers = #tpu.dot_dimension_numbers<[1], [0], [0], [1], [0, 0, 1, 1], [], []>} : vector<1x128xf32>, vector<128x128xf32>, vector<1x128xf32> -> vector<1x128xf32>
      %c0_23 = arith.constant 0 : index
      %c0_24 = arith.constant 0 : index
      %41 = vector.load %arg5[%c0_23, %c0_24] : memref<128x128xf32, #tpu.memory_space<vmem>>, vector<128x128xf32>
      %cst_25 = arith.constant dense<0.000000e+00> : vector<1x128xf32>
      %42 = tpu.matmul %38, %41, %cst_25 {dimension_numbers = #tpu.dot_dimension_numbers<[1], [0], [0], [1], [0, 0, 1, 1], [], []>} : vector<1x128xf32>, vector<128x128xf32>, vector<1x128xf32> -> vector<1x128xf32>
      %43 = arith.mulf %40, %40 : vector<1x128xf32>
      %44 = arith.subf %42, %43 : vector<1x128xf32>
      %45 = vector.broadcast %40 : vector<1x128xf32> to vector<64x128xf32>
      %46 = arith.subf %33, %45 : vector<64x128xf32>
      %cst_26 = arith.constant 9.99999974E-6 : f32
      %47 = vector.broadcast %cst_26 : f32 to vector<1x128xf32>
      %48 = arith.addf %44, %47 : vector<1x128xf32>
      %49 = math.rsqrt %48 : vector<1x128xf32>
      %50 = vector.broadcast %49 : vector<1x128xf32> to vector<64x128xf32>
      %51 = arith.mulf %46, %50 : vector<64x128xf32>
      %c0_27 = arith.constant 0 : index
      %c0_28 = arith.constant 0 : index
      %52 = vector.load %arg3[%c0_27, %c0_28] : memref<1x128xf32, #tpu.memory_space<vmem>>, vector<1x128xf32>
      %53 = vector.broadcast %52 : vector<1x128xf32> to vector<64x128xf32>
      %54 = arith.mulf %51, %53 : vector<64x128xf32>
      %c0_29 = arith.constant 0 : index
      %c0_30 = arith.constant 0 : index
      %55 = vector.load %arg4[%c0_29, %c0_30] : memref<1x128xf32, #tpu.memory_space<vmem>>, vector<1x128xf32>
      %56 = vector.broadcast %55 : vector<1x128xf32> to vector<64x128xf32>
      %57 = arith.addf %54, %56 : vector<64x128xf32>
      %c0_31 = arith.constant 0 : index
      %c0_32 = arith.constant 0 : index
      %58 = vector.load %arg11[%c0_31, %c0_32] : memref<64x128xf32, #tpu.memory_space<vmem>>, vector<64x128xf32>
      tpu.vector_store %arg11[%c0_31, %c0_32], %57 {strides = array<i32>} : memref<64x128xf32, #tpu.memory_space<vmem>>, vector<64x128xf32>,
      %c0_33 = arith.constant 0 : index
      %c0_34 = arith.constant 0 : index
      %59 = vector.load %arg6[%c0_33, %c0_34] : memref<128x384xf32, #tpu.memory_space<vmem>>, vector<128x384xf32>
      %cst_35 = arith.constant dense<0.000000e+00> : vector<64x384xf32>
      %60 = tpu.matmul %57, %59, %cst_35 {dimension_numbers = #tpu.dot_dimension_numbers<[1], [0], [0], [1], [0, 0, 1, 1], [], []>} : vector<64x128xf32>, vector<128x384xf32>, vector<64x384xf32> -> vector<64x384xf32>
      %c0_36 = arith.constant 0 : index
      %c0_37 = arith.constant 0 : index
      %61 = vector.load %arg7[%c0_36, %c0_37] : memref<1x384xf32, #tpu.memory_space<vmem>>, vector<1x384xf32>
      %62 = vector.broadcast %61 : vector<1x384xf32> to vector<64x384xf32>
      %63 = arith.addf %60, %62 : vector<64x384xf32>
      %c0_38 = arith.constant 0 : index
      %c0_39 = arith.constant 0 : index
      %64 = vector.load %arg12[%c0_38, %c0_39] : memref<64x384xf32, #tpu.memory_space<vmem>>, vector<64x384xf32>
      tpu.vector_store %arg12[%c0_38, %c0_39], %63 {strides = array<i32>} : memref<64x384xf32, #tpu.memory_space<vmem>>, vector<64x384xf32>,
    } else {
    }
    %c64_i32 = arith.constant 64 : i32
    %3 = arith.muli %arg1, %c64_i32 : i32
    %4 = tpu.assume_multiple %3, 64 : i32
    %5 = arith.index_cast %4 : i32 to index
    %c0 = arith.constant 0 : index
    %6 = vector.load %arg12[%5, %c0] : memref<64x384xf32, #tpu.memory_space<vmem>>, vector<64x128xf32>
    %c0_1 = arith.constant 0 : index
    %c128 = arith.constant 128 : index
    %7 = vector.load %arg12[%c0_1, %c128] : memref<64x384xf32, #tpu.memory_space<vmem>>, vector<64x128xf32>
    %c0_2 = arith.constant 0 : index
    %c256 = arith.constant 256 : index
    %8 = vector.load %arg12[%c0_2, %c256] : memref<64x384xf32, #tpu.memory_space<vmem>>, vector<64x128xf32>
    %cst = arith.constant dense<0.000000e+00> : vector<64x64xf32>
    %9 = tpu.matmul %6, %7, %cst {dimension_numbers = #tpu.dot_dimension_numbers<[1], [1], [0], [0], [0, 0, 1, 0], [], []>} : vector<64x128xf32>, vector<64x128xf32>, vector<64x64xf32> -> vector<64x64xf32>
    %cst_3 = arith.constant dense<0xFF800000> : vector<64xf32>
    %10 = vector.multi_reduction <maximumf>, %9, %cst_3 [1] : vector<64x64xf32> to vector<64xf32>
    %11 = vector.shape_cast %10 : vector<64xf32> to vector<64x1xf32>
    %12 = vector.broadcast %11 : vector<64x1xf32> to vector<64x64xf32>
    %13 = arith.subf %9, %12 : vector<64x64xf32>
    %14 = math.exp %13 : vector<64x64xf32>
    %cst_4 = arith.constant dense<0.000000e+00> : vector<64xf32>
    %15 = vector.multi_reduction <add>, %14, %cst_4 [1] : vector<64x64xf32> to vector<64xf32>
    %16 = vector.shape_cast %15 : vector<64xf32> to vector<64x1xf32>
    %17 = tpu.reciprocal %16 : vector<64x1xf32> -> vector<64x1xf32>
    %18 = vector.broadcast %17 : vector<64x1xf32> to vector<64x64xf32>
    %19 = arith.mulf %14, %18 : vector<64x64xf32>
    %cst_5 = arith.constant dense<0.000000e+00> : vector<64x128xf32>
    %20 = tpu.matmul %19, %8, %cst_5 {dimension_numbers = #tpu.dot_dimension_numbers<[1], [0], [0], [1], [0, 0, 1, 1], [], []>} : vector<64x64xf32>, vector<64x128xf32>, vector<64x128xf32> -> vector<64x128xf32>
    %c0_6 = arith.constant 0 : index
    %c0_7 = arith.constant 0 : index
    %21 = vector.load %arg8[%c0_6, %c0_7] : memref<128x128xf32, #tpu.memory_space<vmem>>, vector<128x128xf32>
    %cst_8 = arith.constant dense<0.000000e+00> : vector<64x128xf32>
    %22 = tpu.matmul %20, %21, %cst_8 {dimension_numbers = #tpu.dot_dimension_numbers<[1], [0], [0], [1], [0, 0, 1, 1], [], []>} : vector<64x128xf32>, vector<128x128xf32>, vector<64x128xf32> -> vector<64x128xf32>
    %c0_9 = arith.constant 0 : index
    %c0_10 = arith.constant 0 : index
    %23 = vector.load %arg9[%c0_9, %c0_10] : memref<1x128xf32, #tpu.memory_space<vmem>>, vector<1x128xf32>
    %24 = vector.broadcast %23 : vector<1x128xf32> to vector<64x128xf32>
    %25 = arith.addf %22, %24 : vector<64x128xf32>
    %26 = arith.index_cast %4 : i32 to index
    %c0_11 = arith.constant 0 : index
    %27 = vector.load %arg11[%26, %c0_11] : memref<64x128xf32, #tpu.memory_space<vmem>>, vector<64x128xf32>
    %28 = arith.addf %25, %27 : vector<64x128xf32>
    %c0_12 = arith.constant 0 : index
    %c0_13 = arith.constant 0 : index
    %c0_14 = arith.constant 0 : index
    %29 = vector.load %arg10[%c0_12, %c0_13, %c0_14] : memref<1x64x128xf32, #tpu.memory_space<vmem>>, vector<1x64x128xf32>
    %30 = vector.shape_cast %29 : vector<1x64x128xf32> to vector<64x128xf32>
    %31 = vector.shape_cast %28 : vector<64x128xf32> to vector<1x64x128xf32>
    tpu.vector_store %arg10[%c0_12, %c0_13, %c0_14], %31 {strides = array<i32>} : memref<1x64x128xf32, #tpu.memory_space<vmem>>, vector<1x64x128xf32>,
    return
  }
  func.func @transform_0(%arg0: i32, %arg1: i32) -> (i32, i32, i32) {
    %c0_i32 = arith.constant 0 : i32
    %c0_i32_0 = arith.constant 0 : i32
    %c0_i32_1 = arith.constant 0 : i32
    return %arg0, %c0_i32, %c0_i32_0 : i32, i32, i32
  }
  func.func @transform_1(%arg0: i32, %arg1: i32) -> (i32, i32) {
    %c0_i32 = arith.constant 0 : i32
    %c0_i32_0 = arith.constant 0 : i32
    %c0_i32_1 = arith.constant 0 : i32
    return %c0_i32, %c0_i32_0 : i32, i32
  }
  func.func @transform_2(%arg0: i32, %arg1: i32) -> (i32, i32) {
    %c0_i32 = arith.constant 0 : i32
    %c0_i32_0 = arith.constant 0 : i32
    %c0_i32_1 = arith.constant 0 : i32
    return %c0_i32, %c0_i32_0 : i32, i32
  }
  func.func @transform_3(%arg0: i32, %arg1: i32) -> (i32, i32) {
    %c0_i32 = arith.constant 0 : i32
    %c0_i32_0 = arith.constant 0 : i32
    %c0_i32_1 = arith.constant 0 : i32
    return %c0_i32, %c0_i32_0 : i32, i32
  }
  func.func @transform_4(%arg0: i32, %arg1: i32) -> (i32, i32) {
    %c0_i32 = arith.constant 0 : i32
    %c0_i32_0 = arith.constant 0 : i32
    %c0_i32_1 = arith.constant 0 : i32
    return %c0_i32, %c0_i32_0 : i32, i32
  }
  func.func @transform_5(%arg0: i32, %arg1: i32) -> (i32, i32) {
    %c0_i32 = arith.constant 0 : i32
    %c0_i32_0 = arith.constant 0 : i32
    %c0_i32_1 = arith.constant 0 : i32
    return %c0_i32, %c0_i32_0 : i32, i32
  }
  func.func @transform_6(%arg0: i32, %arg1: i32) -> (i32, i32) {
    %c0_i32 = arith.constant 0 : i32
    %c0_i32_0 = arith.constant 0 : i32
    %c0_i32_1 = arith.constant 0 : i32
    return %c0_i32, %c0_i32_0 : i32, i32
  }
  func.func @transform_7(%arg0: i32, %arg1: i32) -> (i32, i32) {
    %c0_i32 = arith.constant 0 : i32
    %c0_i32_0 = arith.constant 0 : i32
    %c0_i32_1 = arith.constant 0 : i32
    return %c0_i32, %c0_i32_0 : i32, i32
  }
  func.func @transform_8(%arg0: i32, %arg1: i32) -> (i32, i32, i32) {
    %c0_i32 = arith.constant 0 : i32
    %c0_i32_0 = arith.constant 0 : i32
    return %arg0, %arg1, %c0_i32 : i32, i32, i32
  }
}

</mosaic_0001>

<llo_original>
// kernel: tpu_custom_call.1
$region0: #{tpu_custom_call.1}
  #allocation0 [shape = 'u32[]', space=smem, size = 0x4, offset = 0x4, fixed_abs, tag = 'smem constant byte address 0x4 - core index']
  #allocation1 [shape = 'u32[144,128]{1,0:T(1,128)}', space=vmem, size = 0x12000, scoped, tag = 'internal scratch']
  #allocation2 [shape = 'f32[64,128]{1,0:T(8,128)}', space=vmem, size = 0x8000, scoped, tag = 'scratch operand']
  #allocation3 [shape = 'f32[64,384]{1,0:T(8,128)}', space=vmem, size = 0x18000, scoped, tag = 'scratch operand']
  %s0 = inlined_call_operand.hbm [shape: f32[2,64,128], index: 0, kind: input, shape index: {}]
  %s1 = inlined_call_operand.vmem [shape: f32[1,128], index: 1, kind: input, shape index: {}]
  %s2 = inlined_call_operand.vmem [shape: f32[1,128], index: 2, kind: input, shape index: {}]
  %s3 = inlined_call_operand.hbm [shape: f32[128,128], index: 3, kind: input, shape index: {}]
  %s4 = inlined_call_operand.hbm [shape: f32[128,384], index: 4, kind: input, shape index: {}]
  %s5 = inlined_call_operand.vmem [shape: f32[1,384], index: 5, kind: input, shape index: {}]
  %s6 = inlined_call_operand.hbm [shape: f32[128,128], index: 6, kind: input, shape index: {}]
  %s7 = inlined_call_operand.vmem [shape: f32[1,128], index: 7, kind: input, shape index: {}]
  %s8 = inlined_call_operand.hbm [shape: f32[2,64,128], index: 8, kind: output, shape index: {}]
  %s9 = sld [smem:[#allocation0]]
  $region85: #{tpu_custom_call.1} parent=0
    _
  %s11 = ssub.s32 1, %s9
  %s12 = scalar_select 0, %s11, %s9
  $region1: #{tpu_custom_call.1} parent=0
    #allocation4 [shape = 'u8[65536]{0}', space=vmem, size = 0x10000, scoped, tag = 'input window, operand 0']
    #allocation5 [shape = 's32[2]{0}', space=sflag, size = 0x8, scoped, tag = 'scoped memory for tpu_custom_call.1']
    #allocation6 [shape = 's32[2]{0}', space=sflag, size = 0x8, scoped, tag = 'scoped memory for tpu_custom_call.1']
    #allocation7 [shape = 'u8[65536]{0}', space=vmem, size = 0x10000, scoped, tag = 'input window, operand 3, single buffered']
    #allocation8 [shape = 's32[1]{0}', space=sflag, size = 0x4, scoped, tag = 'scoped memory for tpu_custom_call.1']
    #allocation9 [shape = 'u8[196608]{0}', space=vmem, size = 0x30000, scoped, tag = 'input window, operand 4, single buffered']
    #allocation10 [shape = 'u8[65536]{0}', space=vmem, size = 0x10000, scoped, tag = 'input window, operand 6, single buffered']
    #allocation11 [shape = 's32[1]{0}', space=sflag, size = 0x4, scoped, tag = 'scoped memory for tpu_custom_call.1']
    #allocation12 [shape = 'u8[65536]{0}', space=vmem, size = 0x10000, scoped, tag = 'output window, operand 0']
    %13 = vsyncpa [#allocation5], 0
    %s14 = scalar_lea.sflag [#allocation5], 1
    %15 = vsyncpa %s14, 0
    %16 = vsyncpa [#allocation8], 0
    %17 = vsyncpa [#allocation11], 0
    %18 = vsyncpa [#allocation6], 0
    %s19 = scalar_lea.sflag [#allocation6], 1
    %20 = vsyncpa %s19, 0
    loop: start=0, step=1, limit=4
    $region2: #{tpu_custom_call.1} parent=1 // loop_pre_header
      _
    $region3: #{tpu_custom_call.1} parent=1 // loop_header
      %s22 = sphi 0, %s26
      %p23 = scmp.ge.s32.totalorder %s22, 4
      %s29 = sphi 0, %s41
      %s30 = sphi 0, %s37
      %s31 = sphi 0, %s29
      %s32 = sphi 0, %s30
      %s33 = sphi 0, %s31
      %s34 = sphi 0, %s32
      %s44 = sphi 0, %s46
      %s47 = sphi 0, %s44
      %s48 = sphi 0, %s47
      %s64 = sphi 0, %s48
      %s68 = sphi 0, %s68
      %s70 = sphi 0, %s68
      %s71 = sphi 0, %s70
      %s85 = sphi 0, %s71
      %s89 = sphi 0, %s89
      %s91 = sphi 0, %s89
      %s92 = sphi 0, %s91
      %s106 = sphi 0, %s92
      %s110 = sphi 0, %s110
      %s112 = sphi 0, %s110
      %s113 = sphi 0, %s112
      %s127 = sphi 0, %s113
      %s131 = sphi 0, %s131
      %s133 = sphi 0, %s131
      %s134 = sphi 0, %s133
      %s148 = sphi 0, %s134
      %s152 = sphi 0, %s152
      %s154 = sphi 0, %s152
      %s155 = sphi 0, %s154
      %s169 = sphi 0, %s155
      %s173 = sphi 0, %s173
      %s175 = sphi 0, %s173
      %s176 = sphi 0, %s175
      %s190 = sphi 0, %s176
      %s194 = sphi 0, %s194
      %s196 = sphi 0, %s194
      %s197 = sphi 0, %s196
      %s211 = sphi 0, %s197
      %s219 = sphi 0, %s221
      %s222 = sphi 0, %s219
      %s223 = sphi 0, %s222
      %s239 = sphi 0, %s223
    $region4: #{tpu_custom_call.1} parent=1 // loop_header_branch
      %25 = sbr.rel (%p23) target = $region8
    $region5: #{tpu_custom_call.1} parent=1 // loop_body
      %s27 = ssub.s32 %s22, 1
      %s28 = ssub.s32 %s22, 2
      %s35 = sadd.s32 1, %s30
      %p36 = scmp.ge.s32.totalorder %s35, 1
      %s37 = scalar_select %p36, 0, %s35
      %s38 = sadd.s32 1, %s29
      %s39 = scalar_select %p36, %s38, %s29
      %p40 = scmp.ge.s32.totalorder %s39, 2
      %s41 = scalar_select %p40, 0, %s39
      %s42 = ssub.s32 %s29, %s41
      %p43 = scmp.eq.s32.totalorder %s42, 0
      %s45 = sadd.s32 %s44, 1
      %s46 = scalar_select %p43, %s44, %s45
      %p49 = pneg %p43
      %p50 = scmp.eq.s32.totalorder %s22, 1
      %p51 = por %p49, %p50
      %p52 = scmp.ne.s32.totalorder %s44, %s47
      %p53 = scmp.eq.s32.totalorder %s22, 0
      %p54 = por %p52, %p53
      %p55 = scmp.ne.s32.totalorder %s44, %s47
      %p56 = scmp.eq.s32.totalorder %s27, 1
      %p57 = por %p55, %p56
      %p58 = scmp.ne.s32.totalorder %s47, %s48
      %p59 = scmp.eq.s32.totalorder %s27, 0
      %p60 = por %p58, %p59
      %p61 = scmp.ne.s32.totalorder %s47, %s48
      %p62 = scmp.eq.s32.totalorder %s28, 1
      %p63 = por %p61, %p62
      %p65 = scmp.ne.s32.totalorder %s48, %s64
      %p66 = scmp.eq.s32.totalorder %s28, 0
      %p67 = por %p65, %p66
      %s69 = sadd.s32 %s68, 1
      %p72 = scmp.eq.s32.totalorder %s22, 1
      %p73 = scmp.ne.s32.totalorder %s68, %s70
      %p74 = scmp.eq.s32.totalorder %s22, 0
      %p75 = por %p73, %p74
      %p76 = scmp.ne.s32.totalorder %s68, %s70
      %p77 = scmp.eq.s32.totalorder %s27, 1
      %p78 = por %p76, %p77
      %p79 = scmp.ne.s32.totalorder %s70, %s71
      %p80 = scmp.eq.s32.totalorder %s27, 0
      %p81 = por %p79, %p80
      %p82 = scmp.ne.s32.totalorder %s70, %s71
      %p83 = scmp.eq.s32.totalorder %s28, 1
      %p84 = por %p82, %p83
      %p86 = scmp.ne.s32.totalorder %s71, %s85
      %p87 = scmp.eq.s32.totalorder %s28, 0
      %p88 = por %p86, %p87
      %s90 = sadd.s32 %s89, 1
      %p93 = scmp.eq.s32.totalorder %s22, 1
      %p94 = scmp.ne.s32.totalorder %s89, %s91
      %p95 = scmp.eq.s32.totalorder %s22, 0
      %p96 = por %p94, %p95
      %p97 = scmp.ne.s32.totalorder %s89, %s91
      %p98 = scmp.eq.s32.totalorder %s27, 1
      %p99 = por %p97, %p98
      %p100 = scmp.ne.s32.totalorder %s91, %s92
      %p101 = scmp.eq.s32.totalorder %s27, 0
      %p102 = por %p100, %p101
      %p103 = scmp.ne.s32.totalorder %s91, %s92
      %p104 = scmp.eq.s32.totalorder %s28, 1
      %p105 = por %p103, %p104
      %p107 = scmp.ne.s32.totalorder %s92, %s106
      %p108 = scmp.eq.s32.totalorder %s28, 0
      %p109 = por %p107, %p108
      %s111 = sadd.s32 %s110, 1
      %p114 = scmp.eq.s32.totalorder %s22, 1
      %p115 = scmp.ne.s32.totalorder %s110, %s112
      %p116 = scmp.eq.s32.totalorder %s22, 0
      %p117 = por %p115, %p116
      %p118 = scmp.ne.s32.totalorder %s110, %s112
      %p119 = scmp.eq.s32.totalorder %s27, 1
      %p120 = por %p118, %p119
      %p121 = scmp.ne.s32.totalorder %s112, %s113
      %p122 = scmp.eq.s32.totalorder %s27, 0
      %p123 = por %p121, %p122
      %p124 = scmp.ne.s32.totalorder %s112, %s113
      %p125 = scmp.eq.s32.totalorder %s28, 1
      %p126 = por %p124, %p125
      %p128 = scmp.ne.s32.totalorder %s113, %s127
      %p129 = scmp.eq.s32.totalorder %s28, 0
      %p130 = por %p128, %p129
      %s132 = sadd.s32 %s131, 1
      %p135 = scmp.eq.s32.totalorder %s22, 1
      %p136 = scmp.ne.s32.totalorder %s131, %s133
      %p137 = scmp.eq.s32.totalorder %s22, 0
      %p138 = por %p136, %p137
      %p139 = scmp.ne.s32.totalorder %s131, %s133
      %p140 = scmp.eq.s32.totalorder %s27, 1
      %p141 = por %p139, %p140
      %p142 = scmp.ne.s32.totalorder %s133, %s134
      %p143 = scmp.eq.s32.totalorder %s27, 0
      %p144 = por %p142, %p143
      %p145 = scmp.ne.s32.totalorder %s133, %s134
      %p146 = scmp.eq.s32.totalorder %s28, 1
      %p147 = por %p145, %p146
      %p149 = scmp.ne.s32.totalorder %s134, %s148
      %p150 = scmp.eq.s32.totalorder %s28, 0
      %p151 = por %p149, %p150
      %s153 = sadd.s32 %s152, 1
      %p156 = scmp.eq.s32.totalorder %s22, 1
      %p157 = scmp.ne.s32.totalorder %s152, %s154
      %p158 = scmp.eq.s32.totalorder %s22, 0
      %p159 = por %p157, %p158
      %p160 = scmp.ne.s32.totalorder %s152, %s154
      %p161 = scmp.eq.s32.totalorder %s27, 1
      %p162 = por %p160, %p161
      %p163 = scmp.ne.s32.totalorder %s154, %s155
      %p164 = scmp.eq.s32.totalorder %s27, 0
      %p165 = por %p163, %p164
      %p166 = scmp.ne.s32.totalorder %s154, %s155
      %p167 = scmp.eq.s32.totalorder %s28, 1
      %p168 = por %p166, %p167
      %p170 = scmp.ne.s32.totalorder %s155, %s169
      %p171 = scmp.eq.s32.totalorder %s28, 0
      %p172 = por %p170, %p171
      %s174 = sadd.s32 %s173, 1
      %p177 = scmp.eq.s32.totalorder %s22, 1
      %p178 = scmp.ne.s32.totalorder %s173, %s175
      %p179 = scmp.eq.s32.totalorder %s22, 0
      %p180 = por %p178, %p179
      %p181 = scmp.ne.s32.totalorder %s173, %s175
      %p182 = scmp.eq.s32.totalorder %s27, 1
      %p183 = por %p181, %p182
      %p184 = scmp.ne.s32.totalorder %s175, %s176
      %p185 = scmp.eq.s32.totalorder %s27, 0
      %p186 = por %p184, %p185
      %p187 = scmp.ne.s32.totalorder %s175, %s176
      %p188 = scmp.eq.s32.totalorder %s28, 1
      %p189 = por %p187, %p188
      %p191 = scmp.ne.s32.totalorder %s176, %s190
      %p192 = scmp.eq.s32.totalorder %s28, 0
      %p193 = por %p191, %p192
      %s195 = sadd.s32 %s194, 1
      %p198 = scmp.eq.s32.totalorder %s22, 1
      %p199 = scmp.ne.s32.totalorder %s194, %s196
      %p200 = scmp.eq.s32.totalorder %s22, 0
      %p201 = por %p199, %p200
      %p202 = scmp.ne.s32.totalorder %s194, %s196
      %p203 = scmp.eq.s32.totalorder %s27, 1
      %p204 = por %p202, %p203
      %p205 = scmp.ne.s32.totalorder %s196, %s197
      %p206 = scmp.eq.s32.totalorder %s27, 0
      %p207 = por %p205, %p206
      %p208 = scmp.ne.s32.totalorder %s196, %s197
      %p209 = scmp.eq.s32.totalorder %s28, 1
      %p210 = por %p208, %p209
      %p212 = scmp.ne.s32.totalorder %s197, %s211
      %p213 = scmp.eq.s32.totalorder %s28, 0
      %p214 = por %p212, %p213
      %s215 = ssub.s32 %s29, %s41
      %s216 = ssub.s32 %s30, %s37
      %s217 = sor.u32 %s215, %s216
      %p218 = scmp.eq.s32.totalorder %s217, 0
      %s220 = sadd.s32 %s219, 1
      %s221 = scalar_select %p218, %s219, %s220
      %p224 = pneg %p218
      %p225 = scmp.eq.s32.totalorder %s22, 1
      %p226 = por %p224, %p225
      %p227 = scmp.ne.s32.totalorder %s219, %s222
      %p228 = scmp.eq.s32.totalorder %s22, 0
      %p229 = por %p227, %p228
      %p230 = scmp.ne.s32.totalorder %s219, %s222
      %p231 = scmp.eq.s32.totalorder %s27, 1
      %p232 = por %p230, %p231
      %p233 = scmp.ne.s32.totalorder %s222, %s223
      %p234 = scmp.eq.s32.totalorder %s27, 0
      %p235 = por %p233, %p234
      %p236 = scmp.ne.s32.totalorder %s222, %s223
      %p237 = scmp.eq.s32.totalorder %s28, 1
      %p238 = por %p236, %p237
      %p240 = scmp.ne.s32.totalorder %s223, %s239
      %p241 = scmp.eq.s32.totalorder %s28, 0
      %p242 = por %p240, %p241
      %p243 = scmp.le.s32.totalorder 1, %s22
      %p244 = scmp.lt.s32.totalorder %s22, 3
      %p245 = pnand %p243, %p244
      %p246 = pneg %p245
      // Predicated region
      $region9: #{tpu_custom_call.1} parent=5 // pred_check
        _
      $region10: #{tpu_custom_call.1} parent=5 // pred_check_branch
        %248 = sbr.rel (%p245) target = $region12
      $region11: #{tpu_custom_call.1} parent=5 // pred_region
        %s249 = ssub.s32 %s22, 1
        // Predicated region
        $region13: #{tpu_custom_call.1} parent=11 // pred_check
          %p250 = pneg %p81
        $region14: #{tpu_custom_call.1} parent=11 // pred_check_branch
          %252 = sbr.rel (%p250) target = $region16
        $region15: #{tpu_custom_call.1} parent=11 // pred_region
          _
        $region16: #{tpu_custom_call.1} parent=11 // pred_fallthru
          _
        // Predicated region
        $region17: #{tpu_custom_call.1} parent=11 // pred_check
          %p253 = pneg %p102
        $region18: #{tpu_custom_call.1} parent=11 // pred_check_branch
          %255 = sbr.rel (%p253) target = $region20
        $region19: #{tpu_custom_call.1} parent=11 // pred_region
          _
        $region20: #{tpu_custom_call.1} parent=11 // pred_fallthru
          _
        // Predicated region
        $region21: #{tpu_custom_call.1} parent=11 // pred_check
          %p256 = pneg %p123
        $region22: #{tpu_custom_call.1} parent=11 // pred_check_branch
          %258 = sbr.rel (%p256) target = $region24
        $region23: #{tpu_custom_call.1} parent=11 // pred_region
          %s260 = ssub.s32 2048, 2048
          %261 = vsyncadd [#allocation8], %s260
          %s262 = sshll.u32 [#allocation7], 4
          %s263 = int_to_ptr.vmem [resolvable:$true] %s262
          %268 = dma.hbm_to_vmem [thread:$0]  %s3, 2048, %s263, [#allocation8], 128, 128, 8
        $region24: #{tpu_custom_call.1} parent=11 // pred_fallthru
          _
        // Predicated region
        $region25: #{tpu_custom_call.1} parent=11 // pred_check
          %p269 = pneg %p144
        $region26: #{tpu_custom_call.1} parent=11 // pred_check_branch
          %271 = sbr.rel (%p269) target = $region28
        $region27: #{tpu_custom_call.1} parent=11 // pred_region
          %s273 = ssub.s32 6144, 6144
          %274 = vsyncadd [#allocation8], %s273
          %s275 = sshll.u32 [#allocation9], 4
          %s276 = int_to_ptr.vmem [resolvable:$true] %s275
          %281 = dma.hbm_to_vmem [thread:$0]  %s4, 6144, %s276, [#allocation8], 384, 384, 24
        $region28: #{tpu_custom_call.1} parent=11 // pred_fallthru
          _
        // Predicated region
        $region29: #{tpu_custom_call.1} parent=11 // pred_check
          %p282 = pneg %p165
        $region30: #{tpu_custom_call.1} parent=11 // pred_check_branch
          %284 = sbr.rel (%p282) target = $region32
        $region31: #{tpu_custom_call.1} parent=11 // pred_region
          _
        $region32: #{tpu_custom_call.1} parent=11 // pred_fallthru
          _
        // Predicated region
        $region33: #{tpu_custom_call.1} parent=11 // pred_check
          %p285 = pneg %p186
        $region34: #{tpu_custom_call.1} parent=11 // pred_check_branch
          %287 = sbr.rel (%p285) target = $region36
        $region35: #{tpu_custom_call.1} parent=11 // pred_region
          %s289 = ssub.s32 2048, 2048
          %290 = vsyncadd [#allocation11], %s289
          %s291 = sshll.u32 [#allocation10], 4
          %s292 = int_to_ptr.vmem [resolvable:$true] %s291
          %297 = dma.hbm_to_vmem [thread:$0]  %s6, 2048, %s292, [#allocation11], 128, 128, 8
        $region36: #{tpu_custom_call.1} parent=11 // pred_fallthru
          _
        // Predicated region
        $region37: #{tpu_custom_call.1} parent=11 // pred_check
          %p298 = pneg %p207
        $region38: #{tpu_custom_call.1} parent=11 // pred_check_branch
          %300 = sbr.rel (%p298) target = $region40
        $region39: #{tpu_custom_call.1} parent=11 // pred_region
          _
        $region40: #{tpu_custom_call.1} parent=11 // pred_fallthru
          _
      $region12: #{tpu_custom_call.1} parent=5 // pred_fallthru
        _
      %p301 = scmp.lt.s32.totalorder %s22, 2
      // Predicated region
      $region41: #{tpu_custom_call.1} parent=5 // pred_check
        %p302 = pneg %p301
      $region42: #{tpu_custom_call.1} parent=5 // pred_check_branch
        %304 = sbr.rel (%p302) target = $region44
      $region43: #{tpu_custom_call.1} parent=5 // pred_region
        // Predicated region
        $region45: #{tpu_custom_call.1} parent=43 // pred_check
          %p305 = pneg %p54
        $region46: #{tpu_custom_call.1} parent=43 // pred_check_branch
          %307 = sbr.rel (%p305) target = $region48
        $region47: #{tpu_custom_call.1} parent=43 // pred_region
          %s308 = sand.u32 %s44, 1
          %s309 = scalar_lea.sflag [#allocation5], %s308
          %s310 = sand.u32 %s44, 1
          %s311 = smul.addr %s310, 64
          %s312 = scalar_lea.vmem [#allocation4], %s311
          %s314 = ssub.s32 1024, 1024
          %315 = vsyncadd %s309, %s314
          %s316 = smul.addr %s29, 8
          %s317 = smul.addr %s316, 128
          %s318 = scalar_lea.hbm %s0, %s317
          %s319 = sshll.u32 %s312, 4
          %s320 = int_to_ptr.vmem [resolvable:$true] %s319
          %325 = dma.hbm_to_vmem [thread:$0]  %s318, 1024, %s320, %s309, 128, 128, 8
        $region48: #{tpu_custom_call.1} parent=43 // pred_fallthru
          _
      $region44: #{tpu_custom_call.1} parent=5 // pred_fallthru
        _
      %p326 = scmp.le.s32.totalorder 1, %s22
      %p327 = scmp.lt.s32.totalorder %s22, 3
      %p328 = pnand %p326, %p327
      %p329 = pneg %p328
      // Predicated region
      $region49: #{tpu_custom_call.1} parent=5 // pred_check
        _
      $region50: #{tpu_custom_call.1} parent=5 // pred_check_branch
        %331 = sbr.rel (%p328) target = $region52
      $region51: #{tpu_custom_call.1} parent=5 // pred_region
        %s332 = ssub.s32 %s22, 1
        %s333 = sand.u32 %s47, 1
        %s334 = scalar_lea.sflag [#allocation5], %s333
        %s335 = sand.u32 %s47, 1
        %s336 = smul.addr %s335, 64
        %s337 = scalar_lea.vmem [#allocation4], %s336
        // Predicated region
        $region53: #{tpu_custom_call.1} parent=51 // pred_check
          %p338 = pneg %p60
        $region54: #{tpu_custom_call.1} parent=51 // pred_check_branch
          %340 = sbr.rel (%p338) target = $region56
        $region55: #{tpu_custom_call.1} parent=51 // pred_region
          %341 = dma.done %s334, 1024
        $region56: #{tpu_custom_call.1} parent=51 // pred_fallthru
          _
        // Predicated region
        $region57: #{tpu_custom_call.1} parent=51 // pred_check
          %p342 = pneg %p123
        $region58: #{tpu_custom_call.1} parent=51 // pred_check_branch
          %344 = sbr.rel (%p342) target = $region60
        $region59: #{tpu_custom_call.1} parent=51 // pred_region
          %345 = dma.done [#allocation8], 2048
        $region60: #{tpu_custom_call.1} parent=51 // pred_fallthru
          _
        // Predicated region
        $region61: #{tpu_custom_call.1} parent=51 // pred_check
          %p346 = pneg %p144
        $region62: #{tpu_custom_call.1} parent=51 // pred_check_branch
          %348 = sbr.rel (%p346) target = $region64
        $region63: #{tpu_custom_call.1} parent=51 // pred_region
          %349 = dma.done [#allocation8], 6144
        $region64: #{tpu_custom_call.1} parent=51 // pred_fallthru
          _
        // Predicated region
        $region65: #{tpu_custom_call.1} parent=51 // pred_check
          %p350 = pneg %p186
        $region66: #{tpu_custom_call.1} parent=51 // pred_check_branch
          %352 = sbr.rel (%p350) target = $region68
        $region67: #{tpu_custom_call.1} parent=51 // pred_region
          %353 = dma.done [#allocation11], 2048
        $region68: #{tpu_custom_call.1} parent=51 // pred_fallthru
          _
        %s354 = sand.u32 %s47, 1
        %s355 = scalar_lea.sflag [#allocation5], %s354
        %s356 = sand.u32 %s47, 1
        %s357 = smul.addr %s356, 64
        %s358 = scalar_lea.vmem [#allocation4], %s357
        %p359 = pneg %p60
        %p360 = pneg %p57
        %p361 = pneg %p81
        %p362 = pneg %p78
        %p363 = pneg %p102
        %p364 = pneg %p99
        %p365 = pneg %p123
        %p366 = pneg %p120
        %p367 = pneg %p144
        %p368 = pneg %p141
        %p369 = pneg %p165
        %p370 = pneg %p162
        %p371 = pneg %p186
        %p372 = pneg %p183
        %p373 = pneg %p207
        %p374 = pneg %p204
        %p375 = pneg %p235
        %p376 = pneg %p232
        %s377 = sand.u32 %s222, 1
        %s378 = scalar_lea.sflag [#allocation6], %s377
        %s379 = sand.u32 %s222, 1
        %s380 = smul.addr %s379, 64
        %s381 = scalar_lea.vmem [#allocation12], %s380
        %s382 = smul.u32 8, %s32
        %p383 = scmp.eq.s32.totalorder %s32, 0
        // Predicated region
        $region69: #{tpu_custom_call.1} parent=51 // pred_check
          %p384 = pneg %p383
        $region70: #{tpu_custom_call.1} parent=51 // pred_check_branch
          %386 = sbr.rel (%p384) target = $region72
        $region71: #{tpu_custom_call.1} parent=51 // pred_region
          %v387 = vld [vmem:[%s337] sm:$0xff]
          %v388 = vld [vmem:[%s337 + $0x8] sm:$0xff]
          %v389 = vld [vmem:[%s337 + $0x10] sm:$0xff]
          %v390 = vld [vmem:[%s337 + $0x18] sm:$0xff]
          %v391 = vld [vmem:[%s337 + $0x20] sm:$0xff]
          %v392 = vld [vmem:[%s337 + $0x28] sm:$0xff]
          %v393 = vld [vmem:[%s337 + $0x30] sm:$0xff]
          %v394 = vld [vmem:[%s337 + $0x38] sm:$0xff]
          %v395 = vadd.f32 %v387, %v388
          %v396 = vadd.f32 %v395, %v389
          %v397 = vadd.f32 %v396, %v390
          %v398 = vadd.f32 %v397, %v391
          %v399 = vadd.f32 %v398, %v392
          %v400 = vadd.f32 %v399, %v393
          %v401 = vadd.f32 %v400, %v394
          %v402 = vrot.slane %v401, 4
          %v403 = vadd.f32 %v401, %v402
          %v404 = vrot.slane %v403, 2
          %v405 = vadd.f32 %v403, %v404
          %v406 = vrot.slane %v405, 1
          %v407 = vadd.f32 %v405, %v406
          %v408 = vmul.f32 %v387, %v387
          %v409 = vmul.f32 %v388, %v388
          %v410 = vmul.f32 %v389, %v389
          %v411 = vmul.f32 %v390, %v390
          %v412 = vmul.f32 %v391, %v391
          %v413 = vmul.f32 %v392, %v392
          %v414 = vmul.f32 %v393, %v393
          %v415 = vmul.f32 %v394, %v394
          %v416 = vadd.f32 %v408, %v409
          %v417 = vadd.f32 %v416, %v410
          %v418 = vadd.f32 %v417, %v411
          %v419 = vadd.f32 %v418, %v412
          %v420 = vadd.f32 %v419, %v413
          %v421 = vadd.f32 %v420, %v414
          %v422 = vadd.f32 %v421, %v415
          %v423 = vrot.slane %v422, 4
          %v424 = vadd.f32 %v422, %v423
          %v425 = vrot.slane %v424, 2
          %v426 = vadd.f32 %v424, %v425
          %v427 = vrot.slane %v426, 1
          %v428 = vadd.f32 %v426, %v427
          %v429 = vld [vmem:[#allocation7] sm:$0xff]
          %v430 = vld [vmem:[#allocation7 + $0x8] sm:$0xff]
          %v431 = vld [vmem:[#allocation7 + $0x10] sm:$0xff]
          %v432 = vld [vmem:[#allocation7 + $0x18] sm:$0xff]
          %v433 = vld [vmem:[#allocation7 + $0x20] sm:$0xff]
          %v434 = vld [vmem:[#allocation7 + $0x28] sm:$0xff]
          %v435 = vld [vmem:[#allocation7 + $0x30] sm:$0xff]
          %v436 = vld [vmem:[#allocation7 + $0x38] sm:$0xff]
          %v437 = vld [vmem:[#allocation7 + $0x40] sm:$0xff]
          %v438 = vld [vmem:[#allocation7 + $0x48] sm:$0xff]
          %v439 = vld [vmem:[#allocation7 + $0x50] sm:$0xff]
          %v440 = vld [vmem:[#allocation7 + $0x58] sm:$0xff]
          %v441 = vld [vmem:[#allocation7 + $0x60] sm:$0xff]
          %v442 = vld [vmem:[#allocation7 + $0x68] sm:$0xff]
          %v443 = vld [vmem:[#allocation7 + $0x70] sm:$0xff]
          %v444 = vld [vmem:[#allocation7 + $0x78] sm:$0xff]
          %445 = vmatprep.subr.mxu0 0.0
          %446 = vmatpush1.msra.mxu0 %v429
          %447 = vmatprep.subr.mxu0 0.0
          %448 = vmatpush1.msra.mxu0 %v430
          %449 = vmatprep.subr.mxu0 0.0
          %450 = vmatpush1.msra.mxu0 %v431
          %451 = vmatprep.subr.mxu0 0.0
          %452 = vmatpush1.msra.mxu0 %v432
          %453 = vmatprep.subr.mxu0 0.0
          %454 = vmatpush1.msra.mxu0 %v433
          %455 = vmatprep.subr.mxu0 0.0
          %456 = vmatpush1.msra.mxu0 %v434
          %457 = vmatprep.subr.mxu0 0.0
          %458 = vmatpush1.msra.mxu0 %v435
          %459 = vmatprep.subr.mxu0 0.0
          %460 = vmatpush1.msra.mxu0 %v436
          %461 = vmatprep.subr.mxu0 0.0
          %462 = vmatpush1.msra.mxu0 %v437
          %463 = vmatprep.subr.mxu0 0.0
          %464 = vmatpush1.msra.mxu0 %v438
          %465 = vmatprep.subr.mxu0 0.0
          %466 = vmatpush1.msra.mxu0 %v439
          %467 = vmatprep.subr.mxu0 0.0
          %468 = vmatpush1.msra.mxu0 %v440
          %469 = vmatprep.subr.mxu0 0.0
          %470 = vmatpush1.msra.mxu0 %v441
          %471 = vmatprep.subr.mxu0 0.0
          %472 = vmatpush1.msra.mxu0 %v442
          %473 = vmatprep.subr.mxu0 0.0
          %474 = vmatpush1.msra.mxu0 %v443
          %475 = vmatprep.subr.mxu0 0.0
          %476 = vmatpush1.msra.mxu0 %v444
          %477 = vmatprep.subr.mxu0 0.0
          %478 = vmatpush1.msra.mxu0 0.0
          %479 = vmatprep.subr.mxu0 0.0
          %480 = vmatpush1.msra.mxu0 0.0
          %481 = vmatprep.subr.mxu0 0.0
          %482 = vmatpush1.msra.mxu0 0.0
          %483 = vmatprep.subr.mxu0 0.0
          %484 = vmatpush1.msra.mxu0 0.0
          %485 = vmatprep.subr.mxu0 0.0
          %486 = vmatpush1.msra.mxu0 0.0
          %487 = vmatprep.subr.mxu0 0.0
          %488 = vmatpush1.msra.mxu0 0.0
          %489 = vmatprep.subr.mxu0 0.0
          %490 = vmatpush1.msra.mxu0 0.0
          %491 = vmatprep.subr.mxu0 0.0
          %492 = vmatpush1.msra.mxu0 0.0
          %493 = vmatprep.subr.mxu0 0.0
          %494 = vmatpush1.msra.mxu0 0.0
          %495 = vmatprep.subr.mxu0 0.0
          %496 = vmatpush1.msra.mxu0 0.0
          %497 = vmatprep.subr.mxu0 0.0
          %498 = vmatpush1.msra.mxu0 0.0
          %499 = vmatprep.subr.mxu0 0.0
          %500 = vmatpush1.msra.mxu0 0.0
          %501 = vmatprep.subr.mxu0 0.0
          %502 = vmatpush1.msra.mxu0 0.0
          %503 = vmatprep.subr.mxu0 0.0
          %504 = vmatpush1.msra.mxu0 0.0
          %505 = vmatprep.subr.mxu0 0.0
          %506 = vmatpush1.msra.mxu0 0.0
          %507 = vmatprep.subr.mxu0 0.0
          %508 = vmatpush1.msra.mxu0 0.0
          %509 = vmatprep.mubr.f32.mxu0 0.0
          %510 = vmatmul.mubr.f32.gmra.mrb[0].mxu0 %v407
          %v511 = vpop.f32.mrb[0].mxu0
          %v512 = vadd.f32 0.0, %v511
          %v513 = vpop.f32.mrb[0].mxu0
          %514 = vdwg.mxu0
          %515 = vmatprep.subr.mxu0 0.0
          %516 = vmatpush1.msra.mxu0 %v429
          %517 = vmatprep.subr.mxu0 0.0
          %518 = vmatpush1.msra.mxu0 %v430
          %519 = vmatprep.subr.mxu0 0.0
          %520 = vmatpush1.msra.mxu0 %v431
          %521 = vmatprep.subr.mxu0 0.0
          %522 = vmatpush1.msra.mxu0 %v432
          %523 = vmatprep.subr.mxu0 0.0
          %524 = vmatpush1.msra.mxu0 %v433
          %525 = vmatprep.subr.mxu0 0.0
          %526 = vmatpush1.msra.mxu0 %v434
          %527 = vmatprep.subr.mxu0 0.0
          %528 = vmatpush1.msra.mxu0 %v435
          %529 = vmatprep.subr.mxu0 0.0
          %530 = vmatpush1.msra.mxu0 %v436
          %531 = vmatprep.subr.mxu0 0.0
          %532 = vmatpush1.msra.mxu0 %v437
          %533 = vmatprep.subr.mxu0 0.0
          %534 = vmatpush1.msra.mxu0 %v438
          %535 = vmatprep.subr.mxu0 0.0
          %536 = vmatpush1.msra.mxu0 %v439
          %537 = vmatprep.subr.mxu0 0.0
          %538 = vmatpush1.msra.mxu0 %v440
          %539 = vmatprep.subr.mxu0 0.0
          %540 = vmatpush1.msra.mxu0 %v441
          %541 = vmatprep.subr.mxu0 0.0
          %542 = vmatpush1.msra.mxu0 %v442
          %543 = vmatprep.subr.mxu0 0.0
          %544 = vmatpush1.msra.mxu0 %v443
          %545 = vmatprep.subr.mxu0 0.0
          %546 = vmatpush1.msra.mxu0 %v444
          %547 = vmatprep.subr.mxu0 0.0
          %548 = vmatpush1.msra.mxu0 0.0
          %549 = vmatprep.subr.mxu0 0.0
          %550 = vmatpush1.msra.mxu0 0.0
          %551 = vmatprep.subr.mxu0 0.0
          %552 = vmatpush1.msra.mxu0 0.0
          %553 = vmatprep.subr.mxu0 0.0
          %554 = vmatpush1.msra.mxu0 0.0
          %555 = vmatprep.subr.mxu0 0.0
          %556 = vmatpush1.msra.mxu0 0.0
          %557 = vmatprep.subr.mxu0 0.0
          %558 = vmatpush1.msra.mxu0 0.0
          %559 = vmatprep.subr.mxu0 0.0
          %560 = vmatpush1.msra.mxu0 0.0
          %561 = vmatprep.subr.mxu0 0.0
          %562 = vmatpush1.msra.mxu0 0.0
          %563 = vmatprep.subr.mxu0 0.0
          %564 = vmatpush1.msra.mxu0 0.0
          %565 = vmatprep.subr.mxu0 0.0
          %566 = vmatpush1.msra.mxu0 0.0
          %567 = vmatprep.subr.mxu0 0.0
          %568 = vmatpush1.msra.mxu0 0.0
          %569 = vmatprep.subr.mxu0 0.0
          %570 = vmatpush1.msra.mxu0 0.0
          %571 = vmatprep.subr.mxu0 0.0
          %572 = vmatpush1.msra.mxu0 0.0
          %573 = vmatprep.subr.mxu0 0.0
          %574 = vmatpush1.msra.mxu0 0.0
          %575 = vmatprep.subr.mxu0 0.0
          %576 = vmatpush1.msra.mxu0 0.0
          %577 = vmatprep.subr.mxu0 0.0
          %578 = vmatpush1.msra.mxu0 0.0
          %579 = vmatprep.mubr.f32.mxu0 0.0
          %580 = vmatmul.mubr.f32.gmra.mrb[0].mxu0 %v428
          %v581 = vpop.f32.mrb[0].mxu0
          %v582 = vadd.f32 0.0, %v581
          %v583 = vpop.f32.mrb[0].mxu0
          %584 = vdwg.mxu0
          %v585 = vmul.f32 %v512, %v512
          %v586 = vsub.f32 %v582, %v585
          %v587 = vlaneseq
          %v588 = vshrl.u32 %v587, 7
          %v589 = vsub.s32 0, %v588
          %v590 = vrot.slane %v512, %v589
          %v591 = vsub.f32 %v387, %v590
          %v592 = vsub.f32 %v388, %v590
          %v593 = vsub.f32 %v389, %v590
          %v594 = vsub.f32 %v390, %v590
          %v595 = vsub.f32 %v391, %v590
          %v596 = vsub.f32 %v392, %v590
          %v597 = vsub.f32 %v393, %v590
          %v598 = vsub.f32 %v394, %v590
          %v599 = vadd.f32 %v586, 1e-05
          %v600 = vrsqrt.pop %v599
          %v601 = vlaneseq
          %v602 = vshrl.u32 %v601, 7
          %v603 = vsub.s32 0, %v602
          %v604 = vrot.slane %v600, %v603
          %v605 = vmul.f32 %v591, %v604
          %v606 = vmul.f32 %v592, %v604
          %v607 = vmul.f32 %v593, %v604
          %v608 = vmul.f32 %v594, %v604
          %v609 = vmul.f32 %v595, %v604
          %v610 = vmul.f32 %v596, %v604
          %v611 = vmul.f32 %v597, %v604
          %v612 = vmul.f32 %v598, %v604
          %v613 = vld [vmem:[%s1] sm:$0x1]
          %v615 = vlaneseq
          %v616 = vshrl.u32 %v615, 7
          %v617 = vsub.s32 0, %v616
          %v618 = vrot.slane %v613, %v617
          %v620 = vmul.f32 %v605, %v618
          %v621 = vmul.f32 %v606, %v618
          %v622 = vmul.f32 %v607, %v618
          %v623 = vmul.f32 %v608, %v618
          %v624 = vmul.f32 %v609, %v618
          %v625 = vmul.f32 %v610, %v618
          %v626 = vmul.f32 %v611, %v618
          %v627 = vmul.f32 %v612, %v618
          %v628 = vld [vmem:[%s2] sm:$0x1]
          %v630 = vlaneseq
          %v631 = vshrl.u32 %v630, 7
          %v632 = vsub.s32 0, %v631
          %v633 = vrot.slane %v628, %v632
          %v635 = vadd.f32 %v620, %v633
          %v636 = vadd.f32 %v621, %v633
          %v637 = vadd.f32 %v622, %v633
          %v638 = vadd.f32 %v623, %v633
          %v639 = vadd.f32 %v624, %v633
          %v640 = vadd.f32 %v625, %v633
          %v641 = vadd.f32 %v626, %v633
          %v642 = vadd.f32 %v627, %v633
          %643 = vst [vmem:[#allocation2] sm:$0xff] %v635
          %644 = vst [vmem:[#allocation2 + $0x8] sm:$0xff] %v636
          %645 = vst [vmem:[#allocation2 + $0x10] sm:$0xff] %v637
          %646 = vst [vmem:[#allocation2 + $0x18] sm:$0xff] %v638
          %647 = vst [vmem:[#allocation2 + $0x20] sm:$0xff] %v639
          %648 = vst [vmem:[#allocation2 + $0x28] sm:$0xff] %v640
          %649 = vst [vmem:[#allocation2 + $0x30] sm:$0xff] %v641
          %650 = vst [vmem:[#allocation2 + $0x38] sm:$0xff] %v642
          %v651 = vld [vmem:[#allocation9] sm:$0xff]
          %v652 = vld [vmem:[#allocation9 + $0x8] sm:$0xff]
          %v653 = vld [vmem:[#allocation9 + $0x10] sm:$0xff]
          %v654 = vld [vmem:[#allocation9 + $0x18] sm:$0xff]
          %v655 = vld [vmem:[#allocation9 + $0x20] sm:$0xff]
          %v656 = vld [vmem:[#allocation9 + $0x28] sm:$0xff]
          %v657 = vld [vmem:[#allocation9 + $0x30] sm:$0xff]
          %v658 = vld [vmem:[#allocation9 + $0x38] sm:$0xff]
          %v659 = vld [vmem:[#allocation9 + $0x40] sm:$0xff]
          %v660 = vld [vmem:[#allocation9 + $0x48] sm:$0xff]
          %v661 = vld [vmem:[#allocation9 + $0x50] sm:$0xff]
          %v662 = vld [vmem:[#allocation9 + $0x58] sm:$0xff]
          %v663 = vld [vmem:[#allocation9 + $0x60] sm:$0xff]
          %v664 = vld [vmem:[#allocation9 + $0x68] sm:$0xff]
          %v665 = vld [vmem:[#allocation9 + $0x70] sm:$0xff]
          %v666 = vld [vmem:[#allocation9 + $0x78] sm:$0xff]
          %v667 = vld [vmem:[#allocation9 + $0x80] sm:$0xff]
          %v668 = vld [vmem:[#allocation9 + $0x88] sm:$0xff]
          %v669 = vld [vmem:[#allocation9 + $0x90] sm:$0xff]
          %v670 = vld [vmem:[#allocation9 + $0x98] sm:$0xff]
          %v671 = vld [vmem:[#allocation9 + $0xa0] sm:$0xff]
          %v672 = vld [vmem:[#allocation9 + $0xa8] sm:$0xff]
          %v673 = vld [vmem:[#allocation9 + $0xb0] sm:$0xff]
          %v674 = vld [vmem:[#allocation9 + $0xb8] sm:$0xff]
          %v675 = vld [vmem:[#allocation9 + $0xc0] sm:$0xff]
          %v676 = vld [vmem:[#allocation9 + $0xc8] sm:$0xff]
          %v677 = vld [vmem:[#allocation9 + $0xd0] sm:$0xff]
          %v678 = vld [vmem:[#allocation9 + $0xd8] sm:$0xff]
          %v679 = vld [vmem:[#allocation9 + $0xe0] sm:$0xff]
          %v680 = vld [vmem:[#allocation9 + $0xe8] sm:$0xff]
          %v681 = vld [vmem:[#allocation9 + $0xf0] sm:$0xff]
          %v682 = vld [vmem:[#allocation9 + $0xf8] sm:$0xff]
          %v683 = vld [vmem:[#allocation9 + $0x100] sm:$0xff]
          %v684 = vld [vmem:[#allocation9 + $0x108] sm:$0xff]
          %v685 = vld [vmem:[#allocation9 + $0x110] sm:$0xff]
          %v686 = vld [vmem:[#allocation9 + $0x118] sm:$0xff]
          %v687 = vld [vmem:[#allocation9 + $0x120] sm:$0xff]
          %v688 = vld [vmem:[#allocation9 + $0x128] sm:$0xff]
          %v689 = vld [vmem:[#allocation9 + $0x130] sm:$0xff]
          %v690 = vld [vmem:[#allocation9 + $0x138] sm:$0xff]
          %v691 = vld [vmem:[#allocation9 + $0x140] sm:$0xff]
          %v692 = vld [vmem:[#allocation9 + $0x148] sm:$0xff]
          %v693 = vld [vmem:[#allocation9 + $0x150] sm:$0xff]
          %v694 = vld [vmem:[#allocation9 + $0x158] sm:$0xff]
          %v695 = vld [vmem:[#allocation9 + $0x160] sm:$0xff]
          %v696 = vld [vmem:[#allocation9 + $0x168] sm:$0xff]
          %v697 = vld [vmem:[#allocation9 + $0x170] sm:$0xff]
          %v698 = vld [vmem:[#allocation9 + $0x178] sm:$0xff]
          %v699 = vld [vmem:[%s5] sm:$0x7]
          %v701 = vlaneseq
          %v702 = vshrl.u32 %v701, 7
          %v703 = vsub.s32 0, %v702
          %v704 = vrot.slane %v699, %v703
          %v705 = vlaneseq
          %v706 = vshrl.u32 %v705, 7
          %v707 = vsub.s32 1, %v706
          %v708 = vrot.slane %v699, %v707
          %v709 = vlaneseq
          %v710 = vshrl.u32 %v709, 7
          %v711 = vsub.s32 2, %v710
          %v712 = vrot.slane %v699, %v711
          %716 = vmatprep.subr.mxu0 %v652
          %717 = vmatpush1.msra.mxu0 %v651
          %718 = vmatprep.subr.mxu0 %v655
          %719 = vmatpush1.msra.mxu0 %v654
          %720 = vmatprep.subr.mxu0 %v658
          %721 = vmatpush1.msra.mxu0 %v657
          %722 = vmatprep.subr.mxu0 %v661
          %723 = vmatpush1.msra.mxu0 %v660
          %724 = vmatprep.subr.mxu0 %v664
          %725 = vmatpush1.msra.mxu0 %v663
          %726 = vmatprep.subr.mxu0 %v667
          %727 = vmatpush1.msra.mxu0 %v666
          %728 = vmatprep.subr.mxu0 %v670
          %729 = vmatpush1.msra.mxu0 %v669
          %730 = vmatprep.subr.mxu0 %v673
          %731 = vmatpush1.msra.mxu0 %v672
          %732 = vmatprep.subr.mxu0 %v676
          %733 = vmatpush1.msra.mxu0 %v675
          %734 = vmatprep.subr.mxu0 %v679
          %735 = vmatpush1.msra.mxu0 %v678
          %736 = vmatprep.subr.mxu0 %v682
          %737 = vmatpush1.msra.mxu0 %v681
          %738 = vmatprep.subr.mxu0 %v685
          %739 = vmatpush1.msra.mxu0 %v684
          %740 = vmatprep.subr.mxu0 %v688
          %741 = vmatpush1.msra.mxu0 %v687
          %742 = vmatprep.subr.mxu0 %v691
          %743 = vmatpush1.msra.mxu0 %v690
          %744 = vmatprep.subr.mxu0 %v694
          %745 = vmatpush1.msra.mxu0 %v693
          %746 = vmatprep.subr.mxu0 %v697
          %747 = vmatpush1.msra.mxu0 %v696
          %748 = vmatprep.subr.mxu0 0.0
          %749 = vmatpush1.msra.mxu0 0.0
          %750 = vmatprep.subr.mxu0 0.0
          %751 = vmatpush1.msra.mxu0 0.0
          %752 = vmatprep.subr.mxu0 0.0
          %753 = vmatpush1.msra.mxu0 0.0
          %754 = vmatprep.subr.mxu0 0.0
          %755 = vmatpush1.msra.mxu0 0.0
          %756 = vmatprep.subr.mxu0 0.0
          %757 = vmatpush1.msra.mxu0 0.0
          %758 = vmatprep.subr.mxu0 0.0
          %759 = vmatpush1.msra.mxu0 0.0
          %760 = vmatprep.subr.mxu0 0.0
          %761 = vmatpush1.msra.mxu0 0.0
          %762 = vmatprep.subr.mxu0 0.0
          %763 = vmatpush1.msra.mxu0 0.0
          %764 = vmatprep.subr.mxu0 0.0
          %765 = vmatpush1.msra.mxu0 0.0
          %766 = vmatprep.subr.mxu0 0.0
          %767 = vmatpush1.msra.mxu0 0.0
          %768 = vmatprep.subr.mxu0 0.0
          %769 = vmatpush1.msra.mxu0 0.0
          %770 = vmatprep.subr.mxu0 0.0
          %771 = vmatpush1.msra.mxu0 0.0
          %772 = vmatprep.subr.mxu0 0.0
          %773 = vmatpush1.msra.mxu0 0.0
          %774 = vmatprep.subr.mxu0 0.0
          %775 = vmatpush1.msra.mxu0 0.0
          %776 = vmatprep.subr.mxu0 0.0
          %777 = vmatpush1.msra.mxu0 0.0
          %778 = vmatprep.subr.mxu0 0.0
          %779 = vmatpush1.msra.mxu0 0.0
          %780 = vmatprep.mubr.f32.mxu0 0.0
          %781 = vmatmul.mubr.f32.gmra.mrb[0].mxu0 %v635
          %v782 = vpop.f32.mrb[0].mxu0
          %v783 = vadd.f32 %v704, %v782
          %v784 = vpop.f32.mrb[0].mxu0
          %v785 = vadd.f32 %v708, %v784
          %786 = vmatprep.mubr.f32.mxu0 0.0
          %787 = vmatmul.mubr.f32.gmra.mrb[0].mxu0 %v636
          %v788 = vpop.f32.mrb[0].mxu0
          %v789 = vadd.f32 %v704, %v788
          %v790 = vpop.f32.mrb[0].mxu0
          %v791 = vadd.f32 %v708, %v790
          %792 = vmatprep.mubr.f32.mxu0 0.0
          %793 = vmatmul.mubr.f32.gmra.mrb[0].mxu0 %v637
          %v794 = vpop.f32.mrb[0].mxu0
          %v795 = vadd.f32 %v704, %v794
          %v796 = vpop.f32.mrb[0].mxu0
          %v797 = vadd.f32 %v708, %v796
          %798 = vmatprep.mubr.f32.mxu0 0.0
          %799 = vmatmul.mubr.f32.gmra.mrb[0].mxu0 %v638
          %v800 = vpop.f32.mrb[0].mxu0
          %v801 = vadd.f32 %v704, %v800
          %v802 = vpop.f32.mrb[0].mxu0
          %v803 = vadd.f32 %v708, %v802
          %804 = vmatprep.mubr.f32.mxu0 0.0
          %805 = vmatmul.mubr.f32.gmra.mrb[0].mxu0 %v639
          %v806 = vpop.f32.mrb[0].mxu0
          %v807 = vadd.f32 %v704, %v806
          %v808 = vpop.f32.mrb[0].mxu0
          %v809 = vadd.f32 %v708, %v808
          %810 = vmatprep.mubr.f32.mxu0 0.0
          %811 = vmatmul.mubr.f32.gmra.mrb[0].mxu0 %v640
          %v812 = vpop.f32.mrb[0].mxu0
          %v813 = vadd.f32 %v704, %v812
          %v814 = vpop.f32.mrb[0].mxu0
          %v815 = vadd.f32 %v708, %v814
          %816 = vmatprep.mubr.f32.mxu0 0.0
          %817 = vmatmul.mubr.f32.gmra.mrb[0].mxu0 %v641
          %v818 = vpop.f32.mrb[0].mxu0
          %v819 = vadd.f32 %v704, %v818
          %v820 = vpop.f32.mrb[0].mxu0
          %v821 = vadd.f32 %v708, %v820
          %822 = vmatprep.mubr.f32.mxu0 0.0
          %823 = vmatmul.mubr.f32.gmra.mrb[0].mxu0 %v642
          %v824 = vpop.f32.mrb[0].mxu0
          %v825 = vadd.f32 %v704, %v824
          %v826 = vpop.f32.mrb[0].mxu0
          %v827 = vadd.f32 %v708, %v826
          %828 = vdwg.mxu0
          %829 = vmatprep.subr.mxu0 0.0
          %830 = vmatpush1.msra.mxu0 %v653
          %831 = vmatprep.subr.mxu0 0.0
          %832 = vmatpush1.msra.mxu0 %v656
          %833 = vmatprep.subr.mxu0 0.0
          %834 = vmatpush1.msra.mxu0 %v659
          %835 = vmatprep.subr.mxu0 0.0
          %836 = vmatpush1.msra.mxu0 %v662
          %837 = vmatprep.subr.mxu0 0.0
          %838 = vmatpush1.msra.mxu0 %v665
          %839 = vmatprep.subr.mxu0 0.0
          %840 = vmatpush1.msra.mxu0 %v668
          %841 = vmatprep.subr.mxu0 0.0
          %842 = vmatpush1.msra.mxu0 %v671
          %843 = vmatprep.subr.mxu0 0.0
          %844 = vmatpush1.msra.mxu0 %v674
          %845 = vmatprep.subr.mxu0 0.0
          %846 = vmatpush1.msra.mxu0 %v677
          %847 = vmatprep.subr.mxu0 0.0
          %848 = vmatpush1.msra.mxu0 %v680
          %849 = vmatprep.subr.mxu0 0.0
          %850 = vmatpush1.msra.mxu0 %v683
          %851 = vmatprep.subr.mxu0 0.0
          %852 = vmatpush1.msra.mxu0 %v686
          %853 = vmatprep.subr.mxu0 0.0
          %854 = vmatpush1.msra.mxu0 %v689
          %855 = vmatprep.subr.mxu0 0.0
          %856 = vmatpush1.msra.mxu0 %v692
          %857 = vmatprep.subr.mxu0 0.0
          %858 = vmatpush1.msra.mxu0 %v695
          %859 = vmatprep.subr.mxu0 0.0
          %860 = vmatpush1.msra.mxu0 %v698
          %861 = vmatprep.subr.mxu0 0.0
          %862 = vmatpush1.msra.mxu0 0.0
          %863 = vmatprep.subr.mxu0 0.0
          %864 = vmatpush1.msra.mxu0 0.0
          %865 = vmatprep.subr.mxu0 0.0
          %866 = vmatpush1.msra.mxu0 0.0
          %867 = vmatprep.subr.mxu0 0.0
          %868 = vmatpush1.msra.mxu0 0.0
          %869 = vmatprep.subr.mxu0 0.0
          %870 = vmatpush1.msra.mxu0 0.0
          %871 = vmatprep.subr.mxu0 0.0
          %872 = vmatpush1.msra.mxu0 0.0
          %873 = vmatprep.subr.mxu0 0.0
          %874 = vmatpush1.msra.mxu0 0.0
          %875 = vmatprep.subr.mxu0 0.0
          %876 = vmatpush1.msra.mxu0 0.0
          %877 = vmatprep.subr.mxu0 0.0
          %878 = vmatpush1.msra.mxu0 0.0
          %879 = vmatprep.subr.mxu0 0.0
          %880 = vmatpush1.msra.mxu0 0.0
          %881 = vmatprep.subr.mxu0 0.0
          %882 = vmatpush1.msra.mxu0 0.0
          %883 = vmatprep.subr.mxu0 0.0
          %884 = vmatpush1.msra.mxu0 0.0
          %885 = vmatprep.subr.mxu0 0.0
          %886 = vmatpush1.msra.mxu0 0.0
          %887 = vmatprep.subr.mxu0 0.0
          %888 = vmatpush1.msra.mxu0 0.0
          %889 = vmatprep.subr.mxu0 0.0
          %890 = vmatpush1.msra.mxu0 0.0
          %891 = vmatprep.subr.mxu0 0.0
          %892 = vmatpush1.msra.mxu0 0.0
          %893 = vmatprep.mubr.f32.mxu0 0.0
          %894 = vmatmul.mubr.f32.gmra.mrb[0].mxu0 %v635
          %v895 = vpop.f32.mrb[0].mxu0
          %v896 = vadd.f32 %v712, %v895
          %v897 = vpop.f32.mrb[0].mxu0
          %898 = vmatprep.mubr.f32.mxu0 0.0
          %899 = vmatmul.mubr.f32.gmra.mrb[0].mxu0 %v636
          %v900 = vpop.f32.mrb[0].mxu0
          %v901 = vadd.f32 %v712, %v900
          %v902 = vpop.f32.mrb[0].mxu0
          %903 = vmatprep.mubr.f32.mxu0 0.0
          %904 = vmatmul.mubr.f32.gmra.mrb[0].mxu0 %v637
          %v905 = vpop.f32.mrb[0].mxu0
          %v906 = vadd.f32 %v712, %v905
          %v907 = vpop.f32.mrb[0].mxu0
          %908 = vmatprep.mubr.f32.mxu0 0.0
          %909 = vmatmul.mubr.f32.gmra.mrb[0].mxu0 %v638
          %v910 = vpop.f32.mrb[0].mxu0
          %v911 = vadd.f32 %v712, %v910
          %v912 = vpop.f32.mrb[0].mxu0
          %913 = vmatprep.mubr.f32.mxu0 0.0
          %914 = vmatmul.mubr.f32.gmra.mrb[0].mxu0 %v639
          %v915 = vpop.f32.mrb[0].mxu0
          %v916 = vadd.f32 %v712, %v915
          %v917 = vpop.f32.mrb[0].mxu0
          %918 = vmatprep.mubr.f32.mxu0 0.0
          %919 = vmatmul.mubr.f32.gmra.mrb[0].mxu0 %v640
          %v920 = vpop.f32.mrb[0].mxu0
          %v921 = vadd.f32 %v712, %v920
          %v922 = vpop.f32.mrb[0].mxu0
          %923 = vmatprep.mubr.f32.mxu0 0.0
          %924 = vmatmul.mubr.f32.gmra.mrb[0].mxu0 %v641
          %v925 = vpop.f32.mrb[0].mxu0
          %v926 = vadd.f32 %v712, %v925
          %v927 = vpop.f32.mrb[0].mxu0
          %928 = vmatprep.mubr.f32.mxu0 0.0
          %929 = vmatmul.mubr.f32.gmra.mrb[0].mxu0 %v642
          %v930 = vpop.f32.mrb[0].mxu0
          %v931 = vadd.f32 %v712, %v930
          %v932 = vpop.f32.mrb[0].mxu0
          %933 = vdwg.mxu0
          %934 = vst [vmem:[#allocation3] sm:$0xff] %v783
          %935 = vst [vmem:[#allocation3 + $0x8] sm:$0xff] %v785
          %936 = vst [vmem:[#allocation3 + $0x10] sm:$0xff] %v896
          %937 = vst [vmem:[#allocation3 + $0x18] sm:$0xff] %v789
          %938 = vst [vmem:[#allocation3 + $0x20] sm:$0xff] %v791
          %939 = vst [vmem:[#allocation3 + $0x28] sm:$0xff] %v901
          %940 = vst [vmem:[#allocation3 + $0x30] sm:$0xff] %v795
          %941 = vst [vmem:[#allocation3 + $0x38] sm:$0xff] %v797
          %942 = vst [vmem:[#allocation3 + $0x40] sm:$0xff] %v906
          %943 = vst [vmem:[#allocation3 + $0x48] sm:$0xff] %v801
          %944 = vst [vmem:[#allocation3 + $0x50] sm:$0xff] %v803
          %945 = vst [vmem:[#allocation3 + $0x58] sm:$0xff] %v911
          %946 = vst [vmem:[#allocation3 + $0x60] sm:$0xff] %v807
          %947 = vst [vmem:[#allocation3 + $0x68] sm:$0xff] %v809
          %948 = vst [vmem:[#allocation3 + $0x70] sm:$0xff] %v916
          %949 = vst [vmem:[#allocation3 + $0x78] sm:$0xff] %v813
          %950 = vst [vmem:[#allocation3 + $0x80] sm:$0xff] %v815
          %951 = vst [vmem:[#allocation3 + $0x88] sm:$0xff] %v921
          %952 = vst [vmem:[#allocation3 + $0x90] sm:$0xff] %v819
          %953 = vst [vmem:[#allocation3 + $0x98] sm:$0xff] %v821
          %954 = vst [vmem:[#allocation3 + $0xa0] sm:$0xff] %v926
          %955 = vst [vmem:[#allocation3 + $0xa8] sm:$0xff] %v825
          %956 = vst [vmem:[#allocation3 + $0xb0] sm:$0xff] %v827
          %957 = vst [vmem:[#allocation3 + $0xb8] sm:$0xff] %v931
        $region72: #{tpu_custom_call.1} parent=51 // pred_fallthru
          _
        %s958 = smul.u32 %s32, 64
        %s959 = sshra.s32 %s958, 3
        %s960 = sand.u32 %s958, 7
        %s961 = smul.u32 %s959, 3
        %s962 = smul.addr %s961, 8
        %s963 = scalar_lea.vmem [#allocation3], %s962
        %v964 = vld [vmem:[%s963] sm:$0xff]
        %v965 = vld [vmem:[%s963 + $0x18] sm:$0xff]
        %v966 = vld [vmem:[%s963 + $0x30] sm:$0xff]
        %v967 = vld [vmem:[%s963 + $0x48] sm:$0xff]
        %v968 = vld [vmem:[%s963 + $0x60] sm:$0xff]
        %v969 = vld [vmem:[%s963 + $0x78] sm:$0xff]
        %v970 = vld [vmem:[%s963 + $0x90] sm:$0xff]
        %v971 = vld [vmem:[%s963 + $0xa8] sm:$0xff]
        %v972 = vld [vmem:[#allocation3 + $0x8] sm:$0xff]
        %v973 = vld [vmem:[#allocation3 + $0x20] sm:$0xff]
        %v974 = vld [vmem:[#allocation3 + $0x38] sm:$0xff]
        %v975 = vld [vmem:[#allocation3 + $0x50] sm:$0xff]
        %v976 = vld [vmem:[#allocation3 + $0x68] sm:$0xff]
        %v977 = vld [vmem:[#allocation3 + $0x80] sm:$0xff]
        %v978 = vld [vmem:[#allocation3 + $0x98] sm:$0xff]
        %v979 = vld [vmem:[#allocation3 + $0xb0] sm:$0xff]
        %v980 = vld [vmem:[#allocation3 + $0x10] sm:$0xff]
        %v981 = vld [vmem:[#allocation3 + $0x28] sm:$0xff]
        %v982 = vld [vmem:[#allocation3 + $0x40] sm:$0xff]
        %v983 = vld [vmem:[#allocation3 + $0x58] sm:$0xff]
        %v984 = vld [vmem:[#allocation3 + $0x70] sm:$0xff]
        %v985 = vld [vmem:[#allocation3 + $0x88] sm:$0xff]
        %v986 = vld [vmem:[#allocation3 + $0xa0] sm:$0xff]
        %v987 = vld [vmem:[#allocation3 + $0xb8] sm:$0xff]
        %988 = vmatprep.subr.mxu0 0.0
        %989 = vmatpush1.xpose.msra.mxu0 %v972
        %990 = vmatprep.subr.mxu0 0.0
        %991 = vmatpush1.xpose.msra.mxu0 %v973
        %992 = vmatprep.subr.mxu0 0.0
        %993 = vmatpush1.xpose.msra.mxu0 %v974
        %994 = vmatprep.subr.mxu0 0.0
        %995 = vmatpush1.xpose.msra.mxu0 %v975
        %996 = vmatprep.subr.mxu0 0.0
        %997 = vmatpush1.xpose.msra.mxu0 %v976
        %998 = vmatprep.subr.mxu0 0.0
        %999 = vmatpush1.xpose.msra.mxu0 %v977
        %1000 = vmatprep.subr.mxu0 0.0
        %1001 = vmatpush1.xpose.msra.mxu0 %v978
        %1002 = vmatprep.subr.mxu0 0.0
        %1003 = vmatpush1.xpose.msra.mxu0 %v979
        %1004 = vmatprep.subr.mxu0 0.0
        %1005 = vmatpush1.xpose.msra.mxu0 0.0
        %1006 = vmatprep.subr.mxu0 0.0
        %1007 = vmatpush1.xpose.msra.mxu0 0.0
        %1008 = vmatprep.subr.mxu0 0.0
        %1009 = vmatpush1.xpose.msra.mxu0 0.0
        %1010 = vmatprep.subr.mxu0 0.0
        %1011 = vmatpush1.xpose.msra.mxu0 0.0
        %1012 = vmatprep.subr.mxu0 0.0
        %1013 = vmatpush1.xpose.msra.mxu0 0.0
        %1014 = vmatprep.subr.mxu0 0.0
        %1015 = vmatpush1.xpose.msra.mxu0 0.0
        %1016 = vmatprep.subr.mxu0 0.0
        %1017 = vmatpush1.xpose.msra.mxu0 0.0
        %1018 = vmatprep.subr.mxu0 0.0
        %1019 = vmatpush1.xpose.msra.mxu0 0.0
        %1020 = vmatprep.subr.mxu0 0.0
        %1021 = vmatpush1.xpose.msra.mxu0 0.0
        %1022 = vmatprep.subr.mxu0 0.0
        %1023 = vmatpush1.xpose.msra.mxu0 0.0
        %1024 = vmatprep.subr.mxu0 0.0
        %1025 = vmatpush1.xpose.msra.mxu0 0.0
        %1026 = vmatprep.subr.mxu0 0.0
        %1027 = vmatpush1.xpose.msra.mxu0 0.0
        %1028 = vmatprep.subr.mxu0 0.0
        %1029 = vmatpush1.xpose.msra.mxu0 0.0
        %1030 = vmatprep.subr.mxu0 0.0
        %1031 = vmatpush1.xpose.msra.mxu0 0.0
        %1032 = vmatprep.subr.mxu0 0.0
        %1033 = vmatpush1.xpose.msra.mxu0 0.0
        %1034 = vmatprep.subr.mxu0 0.0
        %1035 = vmatpush1.xpose.msra.mxu0 0.0
        %1036 = vmatprep.subr.mxu0 0.0
        %1037 = vmatpush1.xpose.msra.mxu0 0.0
        %1038 = vmatprep.subr.mxu0 0.0
        %1039 = vmatpush1.xpose.msra.mxu0 0.0
        %1040 = vmatprep.subr.mxu0 0.0
        %1041 = vmatpush1.xpose.msra.mxu0 0.0
        %1042 = vmatprep.subr.mxu0 0.0
        %1043 = vmatpush1.xpose.msra.mxu0 0.0
        %1044 = vmatprep.subr.mxu0 0.0
        %1045 = vmatpush1.xpose.msra.mxu0 0.0
        %1046 = vmatprep.subr.mxu0 0.0
        %1047 = vmatpush1.xpose.msra.mxu0 0.0
        %1048 = vmatprep.subr.mxu0 0.0
        %1049 = vmatpush1.xpose.msra.mxu0 0.0
        %1050 = vmatprep.subr.mxu0 0.0
        %1051 = vmatpush1.xpose.msra.mxu0 0.0
        %1052 = vmatprep.mubr.f32.mxu0 0.0
        %1053 = vmatmul.mubr.f32.gmra.mrb[0].mxu0 %v964
        %v1054 = vpop.f32.mrb[0].mxu0
        %v1055 = vadd.f32 0.0, %v1054
        %v1056 = vpop.f32.mrb[0].mxu0
        %1057 = vmatprep.mubr.f32.mxu0 0.0
        %1058 = vmatmul.mubr.f32.gmra.mrb[0].mxu0 %v965
        %v1059 = vpop.f32.mrb[0].mxu0
        %v1060 = vadd.f32 0.0, %v1059
        %v1061 = vpop.f32.mrb[0].mxu0
        %1062 = vmatprep.mubr.f32.mxu0 0.0
        %1063 = vmatmul.mubr.f32.gmra.mrb[0].mxu0 %v966
        %v1064 = vpop.f32.mrb[0].mxu0
        %v1065 = vadd.f32 0.0, %v1064
        %v1066 = vpop.f32.mrb[0].mxu0
        %1067 = vmatprep.mubr.f32.mxu0 0.0
        %1068 = vmatmul.mubr.f32.gmra.mrb[0].mxu0 %v967
        %v1069 = vpop.f32.mrb[0].mxu0
        %v1070 = vadd.f32 0.0, %v1069
        %v1071 = vpop.f32.mrb[0].mxu0
        %1072 = vmatprep.mubr.f32.mxu0 0.0
        %1073 = vmatmul.mubr.f32.gmra.mrb[0].mxu0 %v968
        %v1074 = vpop.f32.mrb[0].mxu0
        %v1075 = vadd.f32 0.0, %v1074
        %v1076 = vpop.f32.mrb[0].mxu0
        %1077 = vmatprep.mubr.f32.mxu0 0.0
        %1078 = vmatmul.mubr.f32.gmra.mrb[0].mxu0 %v969
        %v1079 = vpop.f32.mrb[0].mxu0
        %v1080 = vadd.f32 0.0, %v1079
        %v1081 = vpop.f32.mrb[0].mxu0
        %1082 = vmatprep.mubr.f32.mxu0 0.0
        %1083 = vmatmul.mubr.f32.gmra.mrb[0].mxu0 %v970
        %v1084 = vpop.f32.mrb[0].mxu0
        %v1085 = vadd.f32 0.0, %v1084
        %v1086 = vpop.f32.mrb[0].mxu0
        %1087 = vmatprep.mubr.f32.mxu0 0.0
        %1088 = vmatmul.mubr.f32.gmra.mrb[0].mxu0 %v971
        %v1089 = vpop.f32.mrb[0].mxu0
        %v1090 = vadd.f32 0.0, %v1089
        %v1091 = vpop.f32.mrb[0].mxu0
        %1092 = vdwg.mxu0
        %vm1093 = vcmask 523264
        %v1094 = vsel %vm1093, %v1055, -inf
        %1095 = vmax.xlane.f32.xlu0 %v1094
        %v1096 = vpop.xlane.xlu0 %1095
        %v1097 = vsel %vm1093, %v1060, -inf
        %1098 = vmax.xlane.f32.xlu0 %v1097
        %v1099 = vpop.xlane.xlu0 %1098
        %v1100 = vsel %vm1093, %v1065, -inf
        %1101 = vmax.xlane.f32.xlu0 %v1100
        %v1102 = vpop.xlane.xlu0 %1101
        %v1103 = vsel %vm1093, %v1070, -inf
        %1104 = vmax.xlane.f32.xlu0 %v1103
        %v1105 = vpop.xlane.xlu0 %1104
        %v1106 = vsel %vm1093, %v1075, -inf
        %1107 = vmax.xlane.f32.xlu0 %v1106
        %v1108 = vpop.xlane.xlu0 %1107
        %v1109 = vsel %vm1093, %v1080, -inf
        %1110 = vmax.xlane.f32.xlu0 %v1109
        %v1111 = vpop.xlane.xlu0 %1110
        %v1112 = vsel %vm1093, %v1085, -inf
        %1113 = vmax.xlane.f32.xlu0 %v1112
        %v1114 = vpop.xlane.xlu0 %1113
        %v1115 = vsel %vm1093, %v1090, -inf
        %1116 = vmax.xlane.f32.xlu0 %v1115
        %v1117 = vpop.xlane.xlu0 %1116
        %v1118 = vsub.f32 %v1055, %v1096
        %v1119 = vsub.f32 %v1060, %v1099
        %v1120 = vsub.f32 %v1065, %v1102
        %v1121 = vsub.f32 %v1070, %v1105
        %v1122 = vsub.f32 %v1075, %v1108
        %v1123 = vsub.f32 %v1080, %v1111
        %v1124 = vsub.f32 %v1085, %v1114
        %v1125 = vsub.f32 %v1090, %v1117
        %v1126 = vmul.f32 %v1118, 1.442695
        %v1127 = vpow.pop %v1126
        %v1128 = vmul.f32 %v1119, 1.442695
        %v1129 = vpow.pop %v1128
        %v1130 = vmul.f32 %v1120, 1.442695
        %v1131 = vpow.pop %v1130
        %v1132 = vmul.f32 %v1121, 1.442695
        %v1133 = vpow.pop %v1132
        %v1134 = vmul.f32 %v1122, 1.442695
        %v1135 = vpow.pop %v1134
        %v1136 = vmul.f32 %v1123, 1.442695
        %v1137 = vpow.pop %v1136
        %v1138 = vmul.f32 %v1124, 1.442695
        %v1139 = vpow.pop %v1138
        %v1140 = vmul.f32 %v1125, 1.442695
        %v1141 = vpow.pop %v1140
        %v1142 = vsel %vm1093, %v1127, 0.0
        %1143 = vadd.xlane.f32.xlu0 %v1142
        %v1144 = vpop.xlane.xlu0 %1143
        %v1145 = vsel %vm1093, %v1129, 0.0
        %1146 = vadd.xlane.f32.xlu0 %v1145
        %v1147 = vpop.xlane.xlu0 %1146
        %v1148 = vsel %vm1093, %v1131, 0.0
        %1149 = vadd.xlane.f32.xlu0 %v1148
        %v1150 = vpop.xlane.xlu0 %1149
        %v1151 = vsel %vm1093, %v1133, 0.0
        %1152 = vadd.xlane.f32.xlu0 %v1151
        %v1153 = vpop.xlane.xlu0 %1152
        %v1154 = vsel %vm1093, %v1135, 0.0
        %1155 = vadd.xlane.f32.xlu0 %v1154
        %v1156 = vpop.xlane.xlu0 %1155
        %v1157 = vsel %vm1093, %v1137, 0.0
        %1158 = vadd.xlane.f32.xlu0 %v1157
        %v1159 = vpop.xlane.xlu0 %1158
        %v1160 = vsel %vm1093, %v1139, 0.0
        %1161 = vadd.xlane.f32.xlu0 %v1160
        %v1162 = vpop.xlane.xlu0 %1161
        %v1163 = vsel %vm1093, %v1141, 0.0
        %1164 = vadd.xlane.f32.xlu0 %v1163
        %v1165 = vpop.xlane.xlu0 %1164
        %v1166 = vrcp.pop %v1144
        %v1167 = vrcp.pop %v1147
        %v1168 = vrcp.pop %v1150
        %v1169 = vrcp.pop %v1153
        %v1170 = vrcp.pop %v1156
        %v1171 = vrcp.pop %v1159
        %v1172 = vrcp.pop %v1162
        %v1173 = vrcp.pop %v1165
        %v1174 = vmul.f32 %v1127, %v1166
        %v1175 = vmul.f32 %v1129, %v1167
        %v1176 = vmul.f32 %v1131, %v1168
        %v1177 = vmul.f32 %v1133, %v1169
        %v1178 = vmul.f32 %v1135, %v1170
        %v1179 = vmul.f32 %v1137, %v1171
        %v1180 = vmul.f32 %v1139, %v1172
        %v1181 = vmul.f32 %v1141, %v1173
        %v1183 = vsel %vm1093, %v1174, 0
        %v1186 = vsel %vm1093, %v1175, 0
        %v1189 = vsel %vm1093, %v1176, 0
        %v1192 = vsel %vm1093, %v1177, 0
        %v1195 = vsel %vm1093, %v1178, 0
        %v1198 = vsel %vm1093, %v1179, 0
        %v1201 = vsel %vm1093, %v1180, 0
        %v1204 = vsel %vm1093, %v1181, 0
        %1206 = vmatprep.subr.mxu0 0.0
        %1207 = vmatpush1.msra.mxu0 %v980
        %1208 = vmatprep.subr.mxu0 0.0
        %1209 = vmatpush1.msra.mxu0 %v981
        %1210 = vmatprep.subr.mxu0 0.0
        %1211 = vmatpush1.msra.mxu0 %v982
        %1212 = vmatprep.subr.mxu0 0.0
        %1213 = vmatpush1.msra.mxu0 %v983
        %1214 = vmatprep.subr.mxu0 0.0
        %1215 = vmatpush1.msra.mxu0 %v984
        %1216 = vmatprep.subr.mxu0 0.0
        %1217 = vmatpush1.msra.mxu0 %v985
        %1218 = vmatprep.subr.mxu0 0.0
        %1219 = vmatpush1.msra.mxu0 %v986
        %1220 = vmatprep.subr.mxu0 0.0
        %1221 = vmatpush1.msra.mxu0 %v987
        %1222 = vmatprep.subr.mxu0 0.0
        %1223 = vmatpush1.msra.mxu0 0.0
        %1224 = vmatprep.subr.mxu0 0.0
        %1225 = vmatpush1.msra.mxu0 0.0
        %1226 = vmatprep.subr.mxu0 0.0
        %1227 = vmatpush1.msra.mxu0 0.0
        %1228 = vmatprep.subr.mxu0 0.0
        %1229 = vmatpush1.msra.mxu0 0.0
        %1230 = vmatprep.subr.mxu0 0.0
        %1231 = vmatpush1.msra.mxu0 0.0
        %1232 = vmatprep.subr.mxu0 0.0
        %1233 = vmatpush1.msra.mxu0 0.0
        %1234 = vmatprep.subr.mxu0 0.0
        %1235 = vmatpush1.msra.mxu0 0.0
        %1236 = vmatprep.subr.mxu0 0.0
        %1237 = vmatpush1.msra.mxu0 0.0
        %1238 = vmatprep.subr.mxu0 0.0
        %1239 = vmatpush1.msra.mxu0 0.0
        %1240 = vmatprep.subr.mxu0 0.0
        %1241 = vmatpush1.msra.mxu0 0.0
        %1242 = vmatprep.subr.mxu0 0.0
        %1243 = vmatpush1.msra.mxu0 0.0
        %1244 = vmatprep.subr.mxu0 0.0
        %1245 = vmatpush1.msra.mxu0 0.0
        %1246 = vmatprep.subr.mxu0 0.0
        %1247 = vmatpush1.msra.mxu0 0.0
        %1248 = vmatprep.subr.mxu0 0.0
        %1249 = vmatpush1.msra.mxu0 0.0
        %1250 = vmatprep.subr.mxu0 0.0
        %1251 = vmatpush1.msra.mxu0 0.0
        %1252 = vmatprep.subr.mxu0 0.0
        %1253 = vmatpush1.msra.mxu0 0.0
        %1254 = vmatprep.subr.mxu0 0.0
        %1255 = vmatpush1.msra.mxu0 0.0
        %1256 = vmatprep.subr.mxu0 0.0
        %1257 = vmatpush1.msra.mxu0 0.0
        %1258 = vmatprep.subr.mxu0 0.0
        %1259 = vmatpush1.msra.mxu0 0.0
        %1260 = vmatprep.subr.mxu0 0.0
        %1261 = vmatpush1.msra.mxu0 0.0
        %1262 = vmatprep.subr.mxu0 0.0
        %1263 = vmatpush1.msra.mxu0 0.0
        %1264 = vmatprep.subr.mxu0 0.0
        %1265 = vmatpush1.msra.mxu0 0.0
        %1266 = vmatprep.subr.mxu0 0.0
        %1267 = vmatpush1.msra.mxu0 0.0
        %1268 = vmatprep.subr.mxu0 0.0
        %1269 = vmatpush1.msra.mxu0 0.0
        %1270 = vmatprep.mubr.f32.mxu0 0.0
        %1271 = vmatmul.mubr.f32.gmra.mrb[0].mxu0 %v1183
        %v1272 = vpop.f32.mrb[0].mxu0
        %v1273 = vadd.f32 0.0, %v1272
        %v1274 = vpop.f32.mrb[0].mxu0
        %1275 = vmatprep.mubr.f32.mxu0 0.0
        %1276 = vmatmul.mubr.f32.gmra.mrb[0].mxu0 %v1186
        %v1277 = vpop.f32.mrb[0].mxu0
        %v1278 = vadd.f32 0.0, %v1277
        %v1279 = vpop.f32.mrb[0].mxu0
        %1280 = vmatprep.mubr.f32.mxu0 0.0
        %1281 = vmatmul.mubr.f32.gmra.mrb[0].mxu0 %v1189
        %v1282 = vpop.f32.mrb[0].mxu0
        %v1283 = vadd.f32 0.0, %v1282
        %v1284 = vpop.f32.mrb[0].mxu0
        %1285 = vmatprep.mubr.f32.mxu0 0.0
        %1286 = vmatmul.mubr.f32.gmra.mrb[0].mxu0 %v1192
        %v1287 = vpop.f32.mrb[0].mxu0
        %v1288 = vadd.f32 0.0, %v1287
        %v1289 = vpop.f32.mrb[0].mxu0
        %1290 = vmatprep.mubr.f32.mxu0 0.0
        %1291 = vmatmul.mubr.f32.gmra.mrb[0].mxu0 %v1195
        %v1292 = vpop.f32.mrb[0].mxu0
        %v1293 = vadd.f32 0.0, %v1292
        %v1294 = vpop.f32.mrb[0].mxu0
        %1295 = vmatprep.mubr.f32.mxu0 0.0
        %1296 = vmatmul.mubr.f32.gmra.mrb[0].mxu0 %v1198
        %v1297 = vpop.f32.mrb[0].mxu0
        %v1298 = vadd.f32 0.0, %v1297
        %v1299 = vpop.f32.mrb[0].mxu0
        %1300 = vmatprep.mubr.f32.mxu0 0.0
        %1301 = vmatmul.mubr.f32.gmra.mrb[0].mxu0 %v1201
        %v1302 = vpop.f32.mrb[0].mxu0
        %v1303 = vadd.f32 0.0, %v1302
        %v1304 = vpop.f32.mrb[0].mxu0
        %1305 = vmatprep.mubr.f32.mxu0 0.0
        %1306 = vmatmul.mubr.f32.gmra.mrb[0].mxu0 %v1204
        %v1307 = vpop.f32.mrb[0].mxu0
        %v1308 = vadd.f32 0.0, %v1307
        %v1309 = vpop.f32.mrb[0].mxu0
        %1310 = vdwg.mxu0
        %v1311 = vld [vmem:[#allocation10] sm:$0xff]
        %v1312 = vld [vmem:[#allocation10 + $0x8] sm:$0xff]
        %v1313 = vld [vmem:[#allocation10 + $0x10] sm:$0xff]
        %v1314 = vld [vmem:[#allocation10 + $0x18] sm:$0xff]
        %v1315 = vld [vmem:[#allocation10 + $0x20] sm:$0xff]
        %v1316 = vld [vmem:[#allocation10 + $0x28] sm:$0xff]
        %v1317 = vld [vmem:[#allocation10 + $0x30] sm:$0xff]
        %v1318 = vld [vmem:[#allocation10 + $0x38] sm:$0xff]
        %v1319 = vld [vmem:[#allocation10 + $0x40] sm:$0xff]
        %v1320 = vld [vmem:[#allocation10 + $0x48] sm:$0xff]
        %v1321 = vld [vmem:[#allocation10 + $0x50] sm:$0xff]
        %v1322 = vld [vmem:[#allocation10 + $0x58] sm:$0xff]
        %v1323 = vld [vmem:[#allocation10 + $0x60] sm:$0xff]
        %v1324 = vld [vmem:[#allocation10 + $0x68] sm:$0xff]
        %v1325 = vld [vmem:[#allocation10 + $0x70] sm:$0xff]
        %v1326 = vld [vmem:[#allocation10 + $0x78] sm:$0xff]
        %v1327 = vld [vmem:[%s7] sm:$0x1]
        %v1329 = vlaneseq
        %v1330 = vshrl.u32 %v1329, 7
        %v1331 = vsub.s32 0, %v1330
        %v1332 = vrot.slane %v1327, %v1331
        %1334 = vmatprep.subr.mxu0 0.0
        %1335 = vmatpush1.msra.mxu0 %v1311
        %1336 = vmatprep.subr.mxu0 0.0
        %1337 = vmatpush1.msra.mxu0 %v1312
        %1338 = vmatprep.subr.mxu0 0.0
        %1339 = vmatpush1.msra.mxu0 %v1313
        %1340 = vmatprep.subr.mxu0 0.0
        %1341 = vmatpush1.msra.mxu0 %v1314
        %1342 = vmatprep.subr.mxu0 0.0
        %1343 = vmatpush1.msra.mxu0 %v1315
        %1344 = vmatprep.subr.mxu0 0.0
        %1345 = vmatpush1.msra.mxu0 %v1316
        %1346 = vmatprep.subr.mxu0 0.0
        %1347 = vmatpush1.msra.mxu0 %v1317
        %1348 = vmatprep.subr.mxu0 0.0
        %1349 = vmatpush1.msra.mxu0 %v1318
        %1350 = vmatprep.subr.mxu0 0.0
        %1351 = vmatpush1.msra.mxu0 %v1319
        %1352 = vmatprep.subr.mxu0 0.0
        %1353 = vmatpush1.msra.mxu0 %v1320
        %1354 = vmatprep.subr.mxu0 0.0
        %1355 = vmatpush1.msra.mxu0 %v1321
        %1356 = vmatprep.subr.mxu0 0.0
        %1357 = vmatpush1.msra.mxu0 %v1322
        %1358 = vmatprep.subr.mxu0 0.0
        %1359 = vmatpush1.msra.mxu0 %v1323
        %1360 = vmatprep.subr.mxu0 0.0
        %1361 = vmatpush1.msra.mxu0 %v1324
        %1362 = vmatprep.subr.mxu0 0.0
        %1363 = vmatpush1.msra.mxu0 %v1325
        %1364 = vmatprep.subr.mxu0 0.0
        %1365 = vmatpush1.msra.mxu0 %v1326
        %1366 = vmatprep.subr.mxu0 0.0
        %1367 = vmatpush1.msra.mxu0 0.0
        %1368 = vmatprep.subr.mxu0 0.0
        %1369 = vmatpush1.msra.mxu0 0.0
        %1370 = vmatprep.subr.mxu0 0.0
        %1371 = vmatpush1.msra.mxu0 0.0
        %1372 = vmatprep.subr.mxu0 0.0
        %1373 = vmatpush1.msra.mxu0 0.0
        %1374 = vmatprep.subr.mxu0 0.0
        %1375 = vmatpush1.msra.mxu0 0.0
        %1376 = vmatprep.subr.mxu0 0.0
        %1377 = vmatpush1.msra.mxu0 0.0
        %1378 = vmatprep.subr.mxu0 0.0
        %1379 = vmatpush1.msra.mxu0 0.0
        %1380 = vmatprep.subr.mxu0 0.0
        %1381 = vmatpush1.msra.mxu0 0.0
        %1382 = vmatprep.subr.mxu0 0.0
        %1383 = vmatpush1.msra.mxu0 0.0
        %1384 = vmatprep.subr.mxu0 0.0
        %1385 = vmatpush1.msra.mxu0 0.0
        %1386 = vmatprep.subr.mxu0 0.0
        %1387 = vmatpush1.msra.mxu0 0.0
        %1388 = vmatprep.subr.mxu0 0.0
        %1389 = vmatpush1.msra.mxu0 0.0
        %1390 = vmatprep.subr.mxu0 0.0
        %1391 = vmatpush1.msra.mxu0 0.0
        %1392 = vmatprep.subr.mxu0 0.0
        %1393 = vmatpush1.msra.mxu0 0.0
        %1394 = vmatprep.subr.mxu0 0.0
        %1395 = vmatpush1.msra.mxu0 0.0
        %1396 = vmatprep.subr.mxu0 0.0
        %1397 = vmatpush1.msra.mxu0 0.0
        %1398 = vmatprep.mubr.f32.mxu0 0.0
        %1399 = vmatmul.mubr.f32.gmra.mrb[0].mxu0 %v1273
        %v1400 = vpop.f32.mrb[0].mxu0
        %v1401 = vadd.f32 %v1332, %v1400
        %v1402 = vpop.f32.mrb[0].mxu0
        %1403 = vmatprep.mubr.f32.mxu0 0.0
        %1404 = vmatmul.mubr.f32.gmra.mrb[0].mxu0 %v1278
        %v1405 = vpop.f32.mrb[0].mxu0
        %v1406 = vadd.f32 %v1332, %v1405
        %v1407 = vpop.f32.mrb[0].mxu0
        %1408 = vmatprep.mubr.f32.mxu0 0.0
        %1409 = vmatmul.mubr.f32.gmra.mrb[0].mxu0 %v1283
        %v1410 = vpop.f32.mrb[0].mxu0
        %v1411 = vadd.f32 %v1332, %v1410
        %v1412 = vpop.f32.mrb[0].mxu0
        %1413 = vmatprep.mubr.f32.mxu0 0.0
        %1414 = vmatmul.mubr.f32.gmra.mrb[0].mxu0 %v1288
        %v1415 = vpop.f32.mrb[0].mxu0
        %v1416 = vadd.f32 %v1332, %v1415
        %v1417 = vpop.f32.mrb[0].mxu0
        %1418 = vmatprep.mubr.f32.mxu0 0.0
        %1419 = vmatmul.mubr.f32.gmra.mrb[0].mxu0 %v1293
        %v1420 = vpop.f32.mrb[0].mxu0
        %v1421 = vadd.f32 %v1332, %v1420
        %v1422 = vpop.f32.mrb[0].mxu0
        %1423 = vmatprep.mubr.f32.mxu0 0.0
        %1424 = vmatmul.mubr.f32.gmra.mrb[0].mxu0 %v1298
        %v1425 = vpop.f32.mrb[0].mxu0
        %v1426 = vadd.f32 %v1332, %v1425
        %v1427 = vpop.f32.mrb[0].mxu0
        %1428 = vmatprep.mubr.f32.mxu0 0.0
        %1429 = vmatmul.mubr.f32.gmra.mrb[0].mxu0 %v1303
        %v1430 = vpop.f32.mrb[0].mxu0
        %v1431 = vadd.f32 %v1332, %v1430
        %v1432 = vpop.f32.mrb[0].mxu0
        %1433 = vmatprep.mubr.f32.mxu0 0.0
        %1434 = vmatmul.mubr.f32.gmra.mrb[0].mxu0 %v1308
        %v1435 = vpop.f32.mrb[0].mxu0
        %v1436 = vadd.f32 %v1332, %v1435
        %v1437 = vpop.f32.mrb[0].mxu0
        %1438 = vdwg.mxu0
        %s1439 = scalar_lea.vmem [#allocation2], %s958
        %v1440 = vld [vmem:[%s1439] sm:$0xff]
        %v1441 = vld [vmem:[%s1439 + $0x8] sm:$0xff]
        %v1442 = vld [vmem:[%s1439 + $0x10] sm:$0xff]
        %v1443 = vld [vmem:[%s1439 + $0x18] sm:$0xff]
        %v1444 = vld [vmem:[%s1439 + $0x20] sm:$0xff]
        %v1445 = vld [vmem:[%s1439 + $0x28] sm:$0xff]
        %v1446 = vld [vmem:[%s1439 + $0x30] sm:$0xff]
        %v1447 = vld [vmem:[%s1439 + $0x38] sm:$0xff]
        %v1448 = vadd.f32 %v1401, %v1440
        %v1449 = vadd.f32 %v1406, %v1441
        %v1450 = vadd.f32 %v1411, %v1442
        %v1451 = vadd.f32 %v1416, %v1443
        %v1452 = vadd.f32 %v1421, %v1444
        %v1453 = vadd.f32 %v1426, %v1445
        %v1454 = vadd.f32 %v1431, %v1446
        %v1455 = vadd.f32 %v1436, %v1447
        %1456 = vst [vmem:[%s381] sm:$0xff] %v1448
        %1457 = vst [vmem:[%s381 + $0x8] sm:$0xff] %v1449
        %1458 = vst [vmem:[%s381 + $0x10] sm:$0xff] %v1450
        %1459 = vst [vmem:[%s381 + $0x18] sm:$0xff] %v1451
        %1460 = vst [vmem:[%s381 + $0x20] sm:$0xff] %v1452
        %1461 = vst [vmem:[%s381 + $0x28] sm:$0xff] %v1453
        %1462 = vst [vmem:[%s381 + $0x30] sm:$0xff] %v1454
        %1463 = vst [vmem:[%s381 + $0x38] sm:$0xff] %v1455
        %s1464 = sand.u32 %s222, 1
        %s1465 = scalar_lea.sflag [#allocation6], %s1464
        %s1466 = sand.u32 %s222, 1
        %s1467 = smul.addr %s1466, 64
        %s1468 = scalar_lea.vmem [#allocation12], %s1467
        // Predicated region
        $region73: #{tpu_custom_call.1} parent=51 // pred_check
          %p1469 = pneg %p232
        $region74: #{tpu_custom_call.1} parent=51 // pred_check_branch
          %1471 = sbr.rel (%p1469) target = $region76
        $region75: #{tpu_custom_call.1} parent=51 // pred_region
          %s1472 = smul.u32 8, %s32
          %s1474 = ssub.s32 1024, 1024
          %1475 = vsyncadd %s1465, %s1474
          %s1476 = smul.addr %s31, 8
          %s1477 = sadd.s32 %s1472, %s1476
          %s1478 = smul.addr %s1477, 128
          %s1479 = scalar_lea.hbm %s8, %s1478
          %s1480 = sshll.u32 %s1468, 4
          %s1481 = int_to_ptr.vmem [resolvable:$true] %s1480
          %1486 = dma.vmem_to_hbm [thread:$0]  %s1481, 1024, %s1479, %s1465, 128, 128, 8
        $region76: #{tpu_custom_call.1} parent=51 // pred_fallthru
          _
      $region52: #{tpu_custom_call.1} parent=5 // pred_fallthru
        _
      %p1487 = scmp.le.s32.totalorder 2, %s22
      // Predicated region
      $region77: #{tpu_custom_call.1} parent=5 // pred_check
        %p1488 = pneg %p1487
      $region78: #{tpu_custom_call.1} parent=5 // pred_check_branch
        %1490 = sbr.rel (%p1488) target = $region80
      $region79: #{tpu_custom_call.1} parent=5 // pred_region
        %s1491 = ssub.s32 %s22, 2
        // Predicated region
        $region81: #{tpu_custom_call.1} parent=79 // pred_check
          %p1492 = pneg %p238
        $region82: #{tpu_custom_call.1} parent=79 // pred_check_branch
          %1494 = sbr.rel (%p1492) target = $region84
        $region83: #{tpu_custom_call.1} parent=79 // pred_region
          %s1495 = sand.u32 %s223, 1
          %s1496 = scalar_lea.sflag [#allocation6], %s1495
          %s1497 = sand.u32 %s223, 1
          %s1498 = smul.addr %s1497, 64
          %s1499 = scalar_lea.vmem [#allocation12], %s1498
          %1500 = dma.done %s1496, 1024
        $region84: #{tpu_custom_call.1} parent=79 // pred_fallthru
          _
      $region80: #{tpu_custom_call.1} parent=5 // pred_fallthru
        _
    $region6: #{tpu_custom_call.1} parent=1 // loop_footer
      %s26 = sadd.s32 1, %s22
    $region7: #{tpu_custom_call.1} parent=1 // loop_footer_branch
      %21 = sbr.rel target = $region3
    $region8: #{tpu_custom_call.1} parent=1 // loop_exit
      _
    %1501 = vsyncpa [#allocation5], 1
    %s1502 = scalar_lea.sflag [#allocation5], 1
    %1503 = vsyncpa %s1502, 1
    %1504 = vsyncpa [#allocation8], 1
    %1505 = vsyncpa [#allocation11], 1
    %1506 = vsyncpa [#allocation6], 1
    %s1507 = scalar_lea.sflag [#allocation6], 1
    %1508 = vsyncpa %s1507, 1

</llo_original>
